<compile_context>
chip_gen: v7x
topology: tpu7x:2x2x1
jax: 0.10.0
libtpu: 0.0.40
codegen_flags: <defaults>
</compile_context>

<pallas_src>
import functools

import jax
import jax.numpy as jnp
from jax import lax
from jax.experimental import pallas as pl
from jax.experimental.pallas import tpu as pltpu


# ------------------------------ fused forward kernel ------------------------------
# refs layout:
#   inputs : x (T*B, D_in) bf16,
#            [wih_t (D_in_l, 4H) bf16, whh_t (H, 4H) bf16, b (1, 4H) f32] * n_layers,
#            gamma (1, H) f32, beta (1, H) f32, fc_w_t (H, O_pad) f32, fc_b (1, O_pad) f32
#   output : out (T, O_pad) f32
#   scratch: gpre (T*B, 4H) f32, hseq (T*B, H) f32, last (T, H) f32
def _fused_lstm_kernel(*refs, n_layers, seq_len, batch, hidden):
    n_in = 1 + 3 * n_layers + 4
    x_ref = refs[0]
    layer_refs = [refs[1 + 3 * l: 4 + 3 * l] for l in range(n_layers)]
    gamma_ref, beta_ref, fcw_ref, fcb_ref = refs[1 + 3 * n_layers: n_in]
    out_ref = refs[n_in]
    gpre_ref, hseq_ref, last_ref = refs[n_in + 1: n_in + 4]

    T, B, H = seq_len, batch, hidden

    for l, (wih_ref, whh_ref, b_ref) in enumerate(layer_refs):
        is_last = (l == n_layers - 1)

        # Hoisted input projection + bias (off the serial chain): one bf16 MXU matmul
        # per layer with f32 accumulation; result staged in VMEM scratch.
        if l == 0:
            seq_in = x_ref[...]                                   # (T*B, D_in) bf16
        else:
            seq_in = hseq_ref[...].astype(jnp.bfloat16)           # (T*B, H)
        gpre_ref[...] = (
            jnp.dot(seq_in, wih_ref[...], preferred_element_type=jnp.float32)
            + b_ref[...]
        )                                                          # (T*B, 4H) f32

        whh = whh_ref[...]                                         # (H, 4H) bf16, loaded once

        h = None
        c = None
        for t in range(T):  # static unroll: T is small & fixed -> full LLO visibility
            gp = gpre_ref[t * B:(t + 1) * B, :]                    # (B, 4H) f32, one vreg
            if t == 0:
                gates = gp                                         # h0 == 0: skip zero dot
            else:
                gates = gp + jnp.dot(
                    h.astype(jnp.bfloat16), whh,
                    preferred_element_type=jnp.float32)            # (B, 4H)

            # Single EUP pass over the whole (B, 4H) vreg.  g columns of the weights and
            # bias were pre-scaled by 2, so tanh(x) is recovered as 2*sigmoid(2x) - 1.
            sig = jax.nn.sigmoid(gates)
            i_g = sig[:, 0 * H:1 * H]
            f_g = sig[:, 1 * H:2 * H]
            g_g = 2.0 * sig[:, 2 * H:3 * H] - 1.0
            o_g = sig[:, 3 * H:4 * H]

            c = i_g * g_g if t == 0 else f_g * c + i_g * g_g
            h = o_g * jnp.tanh(c)

            if is_last:
                # PyTorch `out[:, -1]`: the last *batch* row at every time step.
                last_ref[t:t + 1, :] = h[B - 1:B, :]
            else:
                hseq_ref[t * B:(t + 1) * B, :] = h                 # next layer's input

    # BatchNorm1d (training-mode batch statistics, biased variance) + Linear, f32.
    z = last_ref[...]                                              # (T, H)
    mean = jnp.mean(z, axis=0, keepdims=True)
    var = jnp.mean((z - mean) ** 2, axis=0, keepdims=True)
    y = (z - mean) * lax.rsqrt(var + 1e-5) * gamma_ref[...] + beta_ref[...]
    # Lane-dense (T, 128) output -> unmasked full-lane stores; wrapper slices to (T, O).
    out_ref[...] = (
        jnp.dot(y, fcw_ref[...], preferred_element_type=jnp.float32) + fcb_ref[...]
    ).astype(out_ref.dtype)


def lstm_network_forward(x, layer_params, gamma, beta, fc_w_t, fc_b):
    """x: (T, B, D_in) f32; layer_params: [(w_ih_t, w_hh_t, b(1,4H))]*n_layers (f32)."""
    T, B, D_in = x.shape
    n_layers = len(layer_params)
    H = layer_params[0][1].shape[0]
    O = fc_w_t.shape[1]
    O_pad = max(128, ((O + 127) // 128) * 128)

    # --- host-side parameter prep (outside the kernel) ---
    flat_params = []
    for (wih_t, whh_t, b) in layer_params:
        # Scale the g-gate columns by 2 (exact power-of-two scaling, commutes with the
        # bf16 cast) so the kernel can use the 2*sigmoid(2x)-1 trick.
        gscale = jnp.concatenate(
            [jnp.ones((1, 2 * H)), 2.0 * jnp.ones((1, H)), jnp.ones((1, H))],
            axis=1).astype(jnp.float32)
        flat_params.append((wih_t * gscale).astype(jnp.bfloat16))
        flat_params.append((whh_t * gscale).astype(jnp.bfloat16))
        flat_params.append((b * gscale).astype(jnp.float32))

    # Zero-pad the FC weight/bias to a full 128-lane output slab.
    fcw_pad = jnp.zeros((H, O_pad), jnp.float32).at[:, :O].set(fc_w_t)
    fcb_pad = jnp.zeros((1, O_pad), jnp.float32).at[:, :O].set(fc_b)

    # (T, B, D) -> (T*B, D): free metadata reshape on a contiguous array; bf16 MXU operand.
    x_flat = x.reshape(T * B, D_in).astype(jnp.bfloat16)

    vmem = pl.BlockSpec(memory_space=pltpu.MemorySpace.VMEM)
    n_in = 1 + 3 * n_layers + 4

    # Advisory cost estimate for XLA scheduling.
    flops = 0
    for l in range(n_layers):
        d_in = D_in if l == 0 else H
        flops += 2 * T * B * d_in * 4 * H          # hoisted input projection
        flops += 2 * T * B * H * 4 * H             # recurrent matmuls
    flops += 2 * T * H * O_pad                     # FC
    transcendentals = (4 * H * B + H * B) * T * n_layers   # 1 sigmoid vreg + tanh(c) per step
    bytes_accessed = int(
        x_flat.size * 2
        + sum(int(a.size) * a.dtype.itemsize for a in flat_params)
        + (gamma.size + beta.size + fcw_pad.size + fcb_pad.size) * 4
        + T * O_pad * 4
    )

    kernel = functools.partial(
        _fused_lstm_kernel, n_layers=n_layers, seq_len=T, batch=B, hidden=H)

    out_pad = pl.pallas_call(
        kernel,
        out_shape=jax.ShapeDtypeStruct((T, O_pad), jnp.float32),
        in_specs=[vmem] * n_in,
        out_specs=vmem,
        scratch_shapes=[
            pltpu.VMEM((T * B, 4 * H), jnp.float32),   # gates_pre slab
            pltpu.VMEM((T * B, H), jnp.float32),       # per-step hidden states (layer input)
            pltpu.VMEM((T, H), jnp.float32),           # out[:, -1] rows for BN/FC
        ],
        cost_estimate=pl.CostEstimate(
            flops=flops,
            transcendentals=transcendentals,
            bytes_accessed=bytes_accessed,
        ),
    )(x_flat, *flat_params, gamma, beta, fcw_pad, fcb_pad)

    return out_pad[:, :O]


# ------------------------------- pure-JAX reference -------------------------------
def ref_lstm_layer(xs, wih_t, whh_t, b, matmul_dtype=jnp.float32):
    B = xs.shape[1]
    H = whh_t.shape[0]
    wih = wih_t.astype(matmul_dtype)
    whh = whh_t.astype(matmul_dtype)

    def step(carry, x_t):
        h, c = carry
        gates = (
            jnp.dot(x_t.astype(matmul_dtype), wih, preferred_element_type=jnp.float32)
            + jnp.dot(h.astype(matmul_dtype), whh, preferred_element_type=jnp.float32)
            + b
        )
        i = jax.nn.sigmoid(gates[:, 0 * H:1 * H])
        f = jax.nn.sigmoid(gates[:, 1 * H:2 * H])
        g = jnp.tanh(gates[:, 2 * H:3 * H])
        o = jax.nn.sigmoid(gates[:, 3 * H:4 * H])
        c = f * c + i * g
        h = o * jnp.tanh(c)
        return (h, c), h

    init = (jnp.zeros((B, H), jnp.float32), jnp.zeros((B, H), jnp.float32))
    _, ys = lax.scan(step, init, xs)
    return ys


def ref_forward(x, layer_params, gamma, beta, fc_w_t, fc_b, matmul_dtype=jnp.float32):
    seq = x
    for (wih_t, whh_t, b) in layer_params:
        seq = ref_lstm_layer(seq, wih_t, whh_t, b, matmul_dtype)
    z = seq[:, -1]
    mean = jnp.mean(z, axis=0, keepdims=True)
    var = jnp.mean((z - mean) ** 2, axis=0, keepdims=True)
    y = (z - mean) / jnp.sqrt(var + 1e-5) * gamma + beta
    return y @ fc_w_t + fc_b


# ---------------------------------------- main ----------------------------------------
if __name__ == "__main__":
    INPUT_DIM, SEQ_LEN, OUTPUT_DIM, HIDDEN_DIM, N_LAYERS = 16, 8, 4, 32, 2
    BATCH = SEQ_LEN  # required by the original module's h0/c0 construction

    key = jax.random.PRNGKey(0)
    keys = iter(jax.random.split(key, 4 * N_LAYERS + 4))

    def uniform(k, shape, bound):
        return jax.random.uniform(k, shape, jnp.float32, -bound, bound)

    bound = 1.0 / jnp.sqrt(HIDDEN_DIM)

    layer_params = []
    for layer in range(N_LAYERS):
        d_in = INPUT_DIM if layer == 0 else HIDDEN_DIM
        w_ih = uniform(next(keys), (4 * HIDDEN_DIM, d_in), bound)        # PyTorch shape
        w_hh = uniform(next(keys), (4 * HIDDEN_DIM, HIDDEN_DIM), bound)
        b_ih = uniform(next(keys), (4 * HIDDEN_DIM,), bound)
        b_hh = uniform(next(keys), (4 * HIDDEN_DIM,), bound)
        layer_params.append(
            (w_ih.T, w_hh.T, (b_ih + b_hh).reshape(1, 4 * HIDDEN_DIM))
        )

    # BatchNorm1d params (PyTorch init: gamma=1, beta=0). Training-mode batch stats.
    gamma = jnp.ones((1, HIDDEN_DIM), jnp.float32)
    beta = jnp.zeros((1, HIDDEN_DIM), jnp.float32)

    # Linear(hidden_dim -> output_dim)
    fc_w = uniform(next(keys), (OUTPUT_DIM, HIDDEN_DIM), bound)
    fc_b = uniform(next(keys), (OUTPUT_DIM,), bound)
    fc_w_t = fc_w.T
    fc_b2 = fc_b.reshape(1, OUTPUT_DIM)

    x = jax.random.normal(next(keys), (SEQ_LEN, BATCH, INPUT_DIM), jnp.float32)

    out = lstm_network_forward(x, layer_params, gamma, beta, fc_w_t, fc_b2)
    out = jax.block_until_ready(out)
    assert out.shape == (SEQ_LEN, OUTPUT_DIM)

    # Compare against a numerics-matched reference (same bf16 matmul operands, f32
    # accumulation / elementwise).  Tolerance covers the tanh-vs-2*sigmoid(2x)-1
    # implementation delta propagated through the recurrence and BatchNorm.
    ref_bf16 = ref_forward(x, layer_params, gamma, beta, fc_w_t, fc_b2,
                           matmul_dtype=jnp.bfloat16)
    assert jnp.allclose(out, ref_bf16, atol=2e-2, rtol=2e-2), (out, ref_bf16)

    # TODO(synk): BatchNorm running-stat updates (training-mode side effect) are not
    # reproduced since they do not affect the forward output.
    print("KERNEL_OK")
</pallas_src>

<mosaic_0001>
module attributes {stable_mosaic.version = 11 : i64} {
  func.func @_fused_lstm_kernel(%arg0: memref<64x16xbf16, #tpu.memory_space<vmem>>, %arg1: memref<16x128xbf16, #tpu.memory_space<vmem>>, %arg2: memref<32x128xbf16, #tpu.memory_space<vmem>>, %arg3: memref<1x128xf32, #tpu.memory_space<vmem>>, %arg4: memref<32x128xbf16, #tpu.memory_space<vmem>>, %arg5: memref<32x128xbf16, #tpu.memory_space<vmem>>, %arg6: memref<1x128xf32, #tpu.memory_space<vmem>>, %arg7: memref<1x32xf32, #tpu.memory_space<vmem>>, %arg8: memref<1x32xf32, #tpu.memory_space<vmem>>, %arg9: memref<32x128xf32, #tpu.memory_space<vmem>>, %arg10: memref<1x128xf32, #tpu.memory_space<vmem>>, %arg11: memref<8x128xf32, #tpu.memory_space<vmem>>, %arg12: memref<64x128xf32, #tpu.memory_space<vmem>>, %arg13: memref<64x32xf32, #tpu.memory_space<vmem>>, %arg14: memref<8x32xf32, #tpu.memory_space<vmem>>) attributes {dimension_semantics = [], scalar_prefetch = 0 : i64, scratch_operands = 3 : i64, tpu.core_type = #tpu.core_type<tc>} {
    %c0 = arith.constant 0 : index
    %c0_0 = arith.constant 0 : index
    %0 = vector.load %arg0[%c0, %c0_0] : memref<64x16xbf16, #tpu.memory_space<vmem>>, vector<64x16xbf16>
    %c0_1 = arith.constant 0 : index
    %c0_2 = arith.constant 0 : index
    %1 = vector.load %arg1[%c0_1, %c0_2] : memref<16x128xbf16, #tpu.memory_space<vmem>>, vector<16x128xbf16>
    %cst = arith.constant dense<0.000000e+00> : vector<64x128xf32>
    %2 = tpu.matmul %0, %1, %cst {dimension_numbers = #tpu.dot_dimension_numbers<[1], [0], [0], [1], [0, 0, 1, 1], [], []>} : vector<64x16xbf16>, vector<16x128xbf16>, vector<64x128xf32> -> vector<64x128xf32>
    %c0_3 = arith.constant 0 : index
    %c0_4 = arith.constant 0 : index
    %3 = vector.load %arg3[%c0_3, %c0_4] : memref<1x128xf32, #tpu.memory_space<vmem>>, vector<1x128xf32>
    %4 = vector.broadcast %3 : vector<1x128xf32> to vector<64x128xf32>
    %5 = arith.addf %2, %4 : vector<64x128xf32>
    %c0_5 = arith.constant 0 : index
    %c0_6 = arith.constant 0 : index
    %6 = vector.load %arg12[%c0_5, %c0_6] : memref<64x128xf32, #tpu.memory_space<vmem>>, vector<64x128xf32>
    tpu.vector_store %arg12[%c0_5, %c0_6], %5 {strides = array<i32>} : memref<64x128xf32, #tpu.memory_space<vmem>>, vector<64x128xf32>,
    %c0_7 = arith.constant 0 : index
    %c0_8 = arith.constant 0 : index
    %7 = vector.load %arg2[%c0_7, %c0_8] : memref<32x128xbf16, #tpu.memory_space<vmem>>, vector<32x128xbf16>
    %c0_9 = arith.constant 0 : index
    %c0_10 = arith.constant 0 : index
    %8 = vector.load %arg12[%c0_9, %c0_10] : memref<64x128xf32, #tpu.memory_space<vmem>>, vector<8x128xf32>
    %9 = arith.negf %8 : vector<8x128xf32>
    %10 = math.exp %9 : vector<8x128xf32>
    %cst_11 = arith.constant 1.000000e+00 : f32
    %11 = vector.broadcast %cst_11 : f32 to vector<8x128xf32>
    %12 = arith.addf %11, %10 : vector<8x128xf32>
    %13 = arith.divf %11, %12 : vector<8x128xf32>
    %14 = vector.extract_strided_slice %13 {offsets = [0, 0], sizes = [8, 32], strides = [1, 1]} : vector<8x128xf32> to vector<8x32xf32>
    %15 = vector.extract_strided_slice %13 {offsets = [0, 64], sizes = [8, 32], strides = [1, 1]} : vector<8x128xf32> to vector<8x32xf32>
    %cst_12 = arith.constant 2.000000e+00 : f32
    %16 = vector.broadcast %cst_12 : f32 to vector<8x32xf32>
    %17 = arith.mulf %16, %15 : vector<8x32xf32>
    %cst_13 = arith.constant 1.000000e+00 : f32
    %18 = vector.broadcast %cst_13 : f32 to vector<8x32xf32>
    %19 = arith.subf %17, %18 : vector<8x32xf32>
    %20 = vector.extract_strided_slice %13 {offsets = [0, 96], sizes = [8, 32], strides = [1, 1]} : vector<8x128xf32> to vector<8x32xf32>
    %21 = arith.mulf %14, %19 : vector<8x32xf32>
    %22 = math.tanh %21 : vector<8x32xf32>
    %23 = arith.mulf %20, %22 : vector<8x32xf32>
    %c0_14 = arith.constant 0 : index
    %c0_15 = arith.constant 0 : index
    %24 = vector.load %arg13[%c0_14, %c0_15] : memref<64x32xf32, #tpu.memory_space<vmem>>, vector<8x32xf32>
    tpu.vector_store %arg13[%c0_14, %c0_15], %23 {strides = array<i32>} : memref<64x32xf32, #tpu.memory_space<vmem>>, vector<8x32xf32>,
    %c8 = arith.constant 8 : index
    %c0_16 = arith.constant 0 : index
    %25 = vector.load %arg12[%c8, %c0_16] : memref<64x128xf32, #tpu.memory_space<vmem>>, vector<8x128xf32>
    %26 = arith.truncf %23 : vector<8x32xf32> to vector<8x32xbf16>
    %cst_17 = arith.constant dense<0.000000e+00> : vector<8x128xf32>
    %27 = tpu.matmul %26, %7, %cst_17 {dimension_numbers = #tpu.dot_dimension_numbers<[1], [0], [0], [1], [0, 0, 1, 1], [], []>} : vector<8x32xbf16>, vector<32x128xbf16>, vector<8x128xf32> -> vector<8x128xf32>
    %28 = arith.addf %25, %27 : vector<8x128xf32>
    %29 = arith.negf %28 : vector<8x128xf32>
    %30 = math.exp %29 : vector<8x128xf32>
    %cst_18 = arith.constant 1.000000e+00 : f32
    %31 = vector.broadcast %cst_18 : f32 to vector<8x128xf32>
    %32 = arith.addf %31, %30 : vector<8x128xf32>
    %33 = arith.divf %31, %32 : vector<8x128xf32>
    %34 = vector.extract_strided_slice %33 {offsets = [0, 0], sizes = [8, 32], strides = [1, 1]} : vector<8x128xf32> to vector<8x32xf32>
    %35 = vector.extract_strided_slice %33 {offsets = [0, 32], sizes = [8, 32], strides = [1, 1]} : vector<8x128xf32> to vector<8x32xf32>
    %36 = vector.extract_strided_slice %33 {offsets = [0, 64], sizes = [8, 32], strides = [1, 1]} : vector<8x128xf32> to vector<8x32xf32>
    %cst_19 = arith.constant 2.000000e+00 : f32
    %37 = vector.broadcast %cst_19 : f32 to vector<8x32xf32>
    %38 = arith.mulf %37, %36 : vector<8x32xf32>
    %cst_20 = arith.constant 1.000000e+00 : f32
    %39 = vector.broadcast %cst_20 : f32 to vector<8x32xf32>
    %40 = arith.subf %38, %39 : vector<8x32xf32>
    %41 = vector.extract_strided_slice %33 {offsets = [0, 96], sizes = [8, 32], strides = [1, 1]} : vector<8x128xf32> to vector<8x32xf32>
    %42 = arith.mulf %35, %21 : vector<8x32xf32>
    %43 = arith.mulf %34, %40 : vector<8x32xf32>
    %44 = arith.addf %42, %43 : vector<8x32xf32>
    %45 = math.tanh %44 : vector<8x32xf32>
    %46 = arith.mulf %41, %45 : vector<8x32xf32>
    %c8_21 = arith.constant 8 : index
    %c0_22 = arith.constant 0 : index
    %47 = vector.load %arg13[%c8_21, %c0_22] : memref<64x32xf32, #tpu.memory_space<vmem>>, vector<8x32xf32>
    tpu.vector_store %arg13[%c8_21, %c0_22], %46 {strides = array<i32>} : memref<64x32xf32, #tpu.memory_space<vmem>>, vector<8x32xf32>,
    %c16 = arith.constant 16 : index
    %c0_23 = arith.constant 0 : index
    %48 = vector.load %arg12[%c16, %c0_23] : memref<64x128xf32, #tpu.memory_space<vmem>>, vector<8x128xf32>
    %49 = arith.truncf %46 : vector<8x32xf32> to vector<8x32xbf16>
    %cst_24 = arith.constant dense<0.000000e+00> : vector<8x128xf32>
    %50 = tpu.matmul %49, %7, %cst_24 {dimension_numbers = #tpu.dot_dimension_numbers<[1], [0], [0], [1], [0, 0, 1, 1], [], []>} : vector<8x32xbf16>, vector<32x128xbf16>, vector<8x128xf32> -> vector<8x128xf32>
    %51 = arith.addf %48, %50 : vector<8x128xf32>
    %52 = arith.negf %51 : vector<8x128xf32>
    %53 = math.exp %52 : vector<8x128xf32>
    %cst_25 = arith.constant 1.000000e+00 : f32
    %54 = vector.broadcast %cst_25 : f32 to vector<8x128xf32>
    %55 = arith.addf %54, %53 : vector<8x128xf32>
    %56 = arith.divf %54, %55 : vector<8x128xf32>
    %57 = vector.extract_strided_slice %56 {offsets = [0, 0], sizes = [8, 32], strides = [1, 1]} : vector<8x128xf32> to vector<8x32xf32>
    %58 = vector.extract_strided_slice %56 {offsets = [0, 32], sizes = [8, 32], strides = [1, 1]} : vector<8x128xf32> to vector<8x32xf32>
    %59 = vector.extract_strided_slice %56 {offsets = [0, 64], sizes = [8, 32], strides = [1, 1]} : vector<8x128xf32> to vector<8x32xf32>
    %cst_26 = arith.constant 2.000000e+00 : f32
    %60 = vector.broadcast %cst_26 : f32 to vector<8x32xf32>
    %61 = arith.mulf %60, %59 : vector<8x32xf32>
    %cst_27 = arith.constant 1.000000e+00 : f32
    %62 = vector.broadcast %cst_27 : f32 to vector<8x32xf32>
    %63 = arith.subf %61, %62 : vector<8x32xf32>
    %64 = vector.extract_strided_slice %56 {offsets = [0, 96], sizes = [8, 32], strides = [1, 1]} : vector<8x128xf32> to vector<8x32xf32>
    %65 = arith.mulf %58, %44 : vector<8x32xf32>
    %66 = arith.mulf %57, %63 : vector<8x32xf32>
    %67 = arith.addf %65, %66 : vector<8x32xf32>
    %68 = math.tanh %67 : vector<8x32xf32>
    %69 = arith.mulf %64, %68 : vector<8x32xf32>
    %c16_28 = arith.constant 16 : index
    %c0_29 = arith.constant 0 : index
    %70 = vector.load %arg13[%c16_28, %c0_29] : memref<64x32xf32, #tpu.memory_space<vmem>>, vector<8x32xf32>
    tpu.vector_store %arg13[%c16_28, %c0_29], %69 {strides = array<i32>} : memref<64x32xf32, #tpu.memory_space<vmem>>, vector<8x32xf32>,
    %c24 = arith.constant 24 : index
    %c0_30 = arith.constant 0 : index
    %71 = vector.load %arg12[%c24, %c0_30] : memref<64x128xf32, #tpu.memory_space<vmem>>, vector<8x128xf32>
    %72 = arith.truncf %69 : vector<8x32xf32> to vector<8x32xbf16>
    %cst_31 = arith.constant dense<0.000000e+00> : vector<8x128xf32>
    %73 = tpu.matmul %72, %7, %cst_31 {dimension_numbers = #tpu.dot_dimension_numbers<[1], [0], [0], [1], [0, 0, 1, 1], [], []>} : vector<8x32xbf16>, vector<32x128xbf16>, vector<8x128xf32> -> vector<8x128xf32>
    %74 = arith.addf %71, %73 : vector<8x128xf32>
    %75 = arith.negf %74 : vector<8x128xf32>
    %76 = math.exp %75 : vector<8x128xf32>
    %cst_32 = arith.constant 1.000000e+00 : f32
    %77 = vector.broadcast %cst_32 : f32 to vector<8x128xf32>
    %78 = arith.addf %77, %76 : vector<8x128xf32>
    %79 = arith.divf %77, %78 : vector<8x128xf32>
    %80 = vector.extract_strided_slice %79 {offsets = [0, 0], sizes = [8, 32], strides = [1, 1]} : vector<8x128xf32> to vector<8x32xf32>
    %81 = vector.extract_strided_slice %79 {offsets = [0, 32], sizes = [8, 32], strides = [1, 1]} : vector<8x128xf32> to vector<8x32xf32>
    %82 = vector.extract_strided_slice %79 {offsets = [0, 64], sizes = [8, 32], strides = [1, 1]} : vector<8x128xf32> to vector<8x32xf32>
    %cst_33 = arith.constant 2.000000e+00 : f32
    %83 = vector.broadcast %cst_33 : f32 to vector<8x32xf32>
    %84 = arith.mulf %83, %82 : vector<8x32xf32>
    %cst_34 = arith.constant 1.000000e+00 : f32
    %85 = vector.broadcast %cst_34 : f32 to vector<8x32xf32>
    %86 = arith.subf %84, %85 : vector<8x32xf32>
    %87 = vector.extract_strided_slice %79 {offsets = [0, 96], sizes = [8, 32], strides = [1, 1]} : vector<8x128xf32> to vector<8x32xf32>
    %88 = arith.mulf %81, %67 : vector<8x32xf32>
    %89 = arith.mulf %80, %86 : vector<8x32xf32>
    %90 = arith.addf %88, %89 : vector<8x32xf32>
    %91 = math.tanh %90 : vector<8x32xf32>
    %92 = arith.mulf %87, %91 : vector<8x32xf32>
    %c24_35 = arith.constant 24 : index
    %c0_36 = arith.constant 0 : index
    %93 = vector.load %arg13[%c24_35, %c0_36] : memref<64x32xf32, #tpu.memory_space<vmem>>, vector<8x32xf32>
    tpu.vector_store %arg13[%c24_35, %c0_36], %92 {strides = array<i32>} : memref<64x32xf32, #tpu.memory_space<vmem>>, vector<8x32xf32>,
    %c32 = arith.constant 32 : index
    %c0_37 = arith.constant 0 : index
    %94 = vector.load %arg12[%c32, %c0_37] : memref<64x128xf32, #tpu.memory_space<vmem>>, vector<8x128xf32>
    %95 = arith.truncf %92 : vector<8x32xf32> to vector<8x32xbf16>
    %cst_38 = arith.constant dense<0.000000e+00> : vector<8x128xf32>
    %96 = tpu.matmul %95, %7, %cst_38 {dimension_numbers = #tpu.dot_dimension_numbers<[1], [0], [0], [1], [0, 0, 1, 1], [], []>} : vector<8x32xbf16>, vector<32x128xbf16>, vector<8x128xf32> -> vector<8x128xf32>
    %97 = arith.addf %94, %96 : vector<8x128xf32>
    %98 = arith.negf %97 : vector<8x128xf32>
    %99 = math.exp %98 : vector<8x128xf32>
    %cst_39 = arith.constant 1.000000e+00 : f32
    %100 = vector.broadcast %cst_39 : f32 to vector<8x128xf32>
    %101 = arith.addf %100, %99 : vector<8x128xf32>
    %102 = arith.divf %100, %101 : vector<8x128xf32>
    %103 = vector.extract_strided_slice %102 {offsets = [0, 0], sizes = [8, 32], strides = [1, 1]} : vector<8x128xf32> to vector<8x32xf32>
    %104 = vector.extract_strided_slice %102 {offsets = [0, 32], sizes = [8, 32], strides = [1, 1]} : vector<8x128xf32> to vector<8x32xf32>
    %105 = vector.extract_strided_slice %102 {offsets = [0, 64], sizes = [8, 32], strides = [1, 1]} : vector<8x128xf32> to vector<8x32xf32>
    %cst_40 = arith.constant 2.000000e+00 : f32
    %106 = vector.broadcast %cst_40 : f32 to vector<8x32xf32>
    %107 = arith.mulf %106, %105 : vector<8x32xf32>
    %cst_41 = arith.constant 1.000000e+00 : f32
    %108 = vector.broadcast %cst_41 : f32 to vector<8x32xf32>
    %109 = arith.subf %107, %108 : vector<8x32xf32>
    %110 = vector.extract_strided_slice %102 {offsets = [0, 96], sizes = [8, 32], strides = [1, 1]} : vector<8x128xf32> to vector<8x32xf32>
    %111 = arith.mulf %104, %90 : vector<8x32xf32>
    %112 = arith.mulf %103, %109 : vector<8x32xf32>
    %113 = arith.addf %111, %112 : vector<8x32xf32>
    %114 = math.tanh %113 : vector<8x32xf32>
    %115 = arith.mulf %110, %114 : vector<8x32xf32>
    %c32_42 = arith.constant 32 : index
    %c0_43 = arith.constant 0 : index
    %116 = vector.load %arg13[%c32_42, %c0_43] : memref<64x32xf32, #tpu.memory_space<vmem>>, vector<8x32xf32>
    tpu.vector_store %arg13[%c32_42, %c0_43], %115 {strides = array<i32>} : memref<64x32xf32, #tpu.memory_space<vmem>>, vector<8x32xf32>,
    %c40 = arith.constant 40 : index
    %c0_44 = arith.constant 0 : index
    %117 = vector.load %arg12[%c40, %c0_44] : memref<64x128xf32, #tpu.memory_space<vmem>>, vector<8x128xf32>
    %118 = arith.truncf %115 : vector<8x32xf32> to vector<8x32xbf16>
    %cst_45 = arith.constant dense<0.000000e+00> : vector<8x128xf32>
    %119 = tpu.matmul %118, %7, %cst_45 {dimension_numbers = #tpu.dot_dimension_numbers<[1], [0], [0], [1], [0, 0, 1, 1], [], []>} : vector<8x32xbf16>, vector<32x128xbf16>, vector<8x128xf32> -> vector<8x128xf32>
    %120 = arith.addf %117, %119 : vector<8x128xf32>
    %121 = arith.negf %120 : vector<8x128xf32>
    %122 = math.exp %121 : vector<8x128xf32>
    %cst_46 = arith.constant 1.000000e+00 : f32
    %123 = vector.broadcast %cst_46 : f32 to vector<8x128xf32>
    %124 = arith.addf %123, %122 : vector<8x128xf32>
    %125 = arith.divf %123, %124 : vector<8x128xf32>
    %126 = vector.extract_strided_slice %125 {offsets = [0, 0], sizes = [8, 32], strides = [1, 1]} : vector<8x128xf32> to vector<8x32xf32>
    %127 = vector.extract_strided_slice %125 {offsets = [0, 32], sizes = [8, 32], strides = [1, 1]} : vector<8x128xf32> to vector<8x32xf32>
    %128 = vector.extract_strided_slice %125 {offsets = [0, 64], sizes = [8, 32], strides = [1, 1]} : vector<8x128xf32> to vector<8x32xf32>
    %cst_47 = arith.constant 2.000000e+00 : f32
    %129 = vector.broadcast %cst_47 : f32 to vector<8x32xf32>
    %130 = arith.mulf %129, %128 : vector<8x32xf32>
    %cst_48 = arith.constant 1.000000e+00 : f32
    %131 = vector.broadcast %cst_48 : f32 to vector<8x32xf32>
    %132 = arith.subf %130, %131 : vector<8x32xf32>
    %133 = vector.extract_strided_slice %125 {offsets = [0, 96], sizes = [8, 32], strides = [1, 1]} : vector<8x128xf32> to vector<8x32xf32>
    %134 = arith.mulf %127, %113 : vector<8x32xf32>
    %135 = arith.mulf %126, %132 : vector<8x32xf32>
    %136 = arith.addf %134, %135 : vector<8x32xf32>
    %137 = math.tanh %136 : vector<8x32xf32>
    %138 = arith.mulf %133, %137 : vector<8x32xf32>
    %c40_49 = arith.constant 40 : index
    %c0_50 = arith.constant 0 : index
    %139 = vector.load %arg13[%c40_49, %c0_50] : memref<64x32xf32, #tpu.memory_space<vmem>>, vector<8x32xf32>
    tpu.vector_store %arg13[%c40_49, %c0_50], %138 {strides = array<i32>} : memref<64x32xf32, #tpu.memory_space<vmem>>, vector<8x32xf32>,
    %c48 = arith.constant 48 : index
    %c0_51 = arith.constant 0 : index
    %140 = vector.load %arg12[%c48, %c0_51] : memref<64x128xf32, #tpu.memory_space<vmem>>, vector<8x128xf32>
    %141 = arith.truncf %138 : vector<8x32xf32> to vector<8x32xbf16>
    %cst_52 = arith.constant dense<0.000000e+00> : vector<8x128xf32>
    %142 = tpu.matmul %141, %7, %cst_52 {dimension_numbers = #tpu.dot_dimension_numbers<[1], [0], [0], [1], [0, 0, 1, 1], [], []>} : vector<8x32xbf16>, vector<32x128xbf16>, vector<8x128xf32> -> vector<8x128xf32>
    %143 = arith.addf %140, %142 : vector<8x128xf32>
    %144 = arith.negf %143 : vector<8x128xf32>
    %145 = math.exp %144 : vector<8x128xf32>
    %cst_53 = arith.constant 1.000000e+00 : f32
    %146 = vector.broadcast %cst_53 : f32 to vector<8x128xf32>
    %147 = arith.addf %146, %145 : vector<8x128xf32>
    %148 = arith.divf %146, %147 : vector<8x128xf32>
    %149 = vector.extract_strided_slice %148 {offsets = [0, 0], sizes = [8, 32], strides = [1, 1]} : vector<8x128xf32> to vector<8x32xf32>
    %150 = vector.extract_strided_slice %148 {offsets = [0, 32], sizes = [8, 32], strides = [1, 1]} : vector<8x128xf32> to vector<8x32xf32>
    %151 = vector.extract_strided_slice %148 {offsets = [0, 64], sizes = [8, 32], strides = [1, 1]} : vector<8x128xf32> to vector<8x32xf32>
    %cst_54 = arith.constant 2.000000e+00 : f32
    %152 = vector.broadcast %cst_54 : f32 to vector<8x32xf32>
    %153 = arith.mulf %152, %151 : vector<8x32xf32>
    %cst_55 = arith.constant 1.000000e+00 : f32
    %154 = vector.broadcast %cst_55 : f32 to vector<8x32xf32>
    %155 = arith.subf %153, %154 : vector<8x32xf32>
    %156 = vector.extract_strided_slice %148 {offsets = [0, 96], sizes = [8, 32], strides = [1, 1]} : vector<8x128xf32> to vector<8x32xf32>
    %157 = arith.mulf %150, %136 : vector<8x32xf32>
    %158 = arith.mulf %149, %155 : vector<8x32xf32>
    %159 = arith.addf %157, %158 : vector<8x32xf32>
    %160 = math.tanh %159 : vector<8x32xf32>
    %161 = arith.mulf %156, %160 : vector<8x32xf32>
    %c48_56 = arith.constant 48 : index
    %c0_57 = arith.constant 0 : index
    %162 = vector.load %arg13[%c48_56, %c0_57] : memref<64x32xf32, #tpu.memory_space<vmem>>, vector<8x32xf32>
    tpu.vector_store %arg13[%c48_56, %c0_57], %161 {strides = array<i32>} : memref<64x32xf32, #tpu.memory_space<vmem>>, vector<8x32xf32>,
    %c56 = arith.constant 56 : index
    %c0_58 = arith.constant 0 : index
    %163 = vector.load %arg12[%c56, %c0_58] : memref<64x128xf32, #tpu.memory_space<vmem>>, vector<8x128xf32>
    %164 = arith.truncf %161 : vector<8x32xf32> to vector<8x32xbf16>
    %cst_59 = arith.constant dense<0.000000e+00> : vector<8x128xf32>
    %165 = tpu.matmul %164, %7, %cst_59 {dimension_numbers = #tpu.dot_dimension_numbers<[1], [0], [0], [1], [0, 0, 1, 1], [], []>} : vector<8x32xbf16>, vector<32x128xbf16>, vector<8x128xf32> -> vector<8x128xf32>
    %166 = arith.addf %163, %165 : vector<8x128xf32>
    %167 = arith.negf %166 : vector<8x128xf32>
    %168 = math.exp %167 : vector<8x128xf32>
    %cst_60 = arith.constant 1.000000e+00 : f32
    %169 = vector.broadcast %cst_60 : f32 to vector<8x128xf32>
    %170 = arith.addf %169, %168 : vector<8x128xf32>
    %171 = arith.divf %169, %170 : vector<8x128xf32>
    %172 = vector.extract_strided_slice %171 {offsets = [0, 0], sizes = [8, 32], strides = [1, 1]} : vector<8x128xf32> to vector<8x32xf32>
    %173 = vector.extract_strided_slice %171 {offsets = [0, 32], sizes = [8, 32], strides = [1, 1]} : vector<8x128xf32> to vector<8x32xf32>
    %174 = vector.extract_strided_slice %171 {offsets = [0, 64], sizes = [8, 32], strides = [1, 1]} : vector<8x128xf32> to vector<8x32xf32>
    %cst_61 = arith.constant 2.000000e+00 : f32
    %175 = vector.broadcast %cst_61 : f32 to vector<8x32xf32>
    %176 = arith.mulf %175, %174 : vector<8x32xf32>
    %cst_62 = arith.constant 1.000000e+00 : f32
    %177 = vector.broadcast %cst_62 : f32 to vector<8x32xf32>
    %178 = arith.subf %176, %177 : vector<8x32xf32>
    %179 = vector.extract_strided_slice %171 {offsets = [0, 96], sizes = [8, 32], strides = [1, 1]} : vector<8x128xf32> to vector<8x32xf32>
    %180 = arith.mulf %173, %159 : vector<8x32xf32>
    %181 = arith.mulf %172, %178 : vector<8x32xf32>
    %182 = arith.addf %180, %181 : vector<8x32xf32>
    %183 = math.tanh %182 : vector<8x32xf32>
    %184 = arith.mulf %179, %183 : vector<8x32xf32>
    %c56_63 = arith.constant 56 : index
    %c0_64 = arith.constant 0 : index
    %185 = vector.load %arg13[%c56_63, %c0_64] : memref<64x32xf32, #tpu.memory_space<vmem>>, vector<8x32xf32>
    tpu.vector_store %arg13[%c56_63, %c0_64], %184 {strides = array<i32>} : memref<64x32xf32, #tpu.memory_space<vmem>>, vector<8x32xf32>,
    %c0_65 = arith.constant 0 : index
    %c0_66 = arith.constant 0 : index
    %186 = vector.load %arg13[%c0_65, %c0_66] : memref<64x32xf32, #tpu.memory_space<vmem>>, vector<64x32xf32>
    %187 = arith.truncf %186 : vector<64x32xf32> to vector<64x32xbf16>
    %c0_67 = arith.constant 0 : index
    %c0_68 = arith.constant 0 : index
    %188 = vector.load %arg4[%c0_67, %c0_68] : memref<32x128xbf16, #tpu.memory_space<vmem>>, vector<32x128xbf16>
    %cst_69 = arith.constant dense<0.000000e+00> : vector<64x128xf32>
    %189 = tpu.matmul %187, %188, %cst_69 {dimension_numbers = #tpu.dot_dimension_numbers<[1], [0], [0], [1], [0, 0, 1, 1], [], []>} : vector<64x32xbf16>, vector<32x128xbf16>, vector<64x128xf32> -> vector<64x128xf32>
    %c0_70 = arith.constant 0 : index
    %c0_71 = arith.constant 0 : index
    %190 = vector.load %arg6[%c0_70, %c0_71] : memref<1x128xf32, #tpu.memory_space<vmem>>, vector<1x128xf32>
    %191 = vector.broadcast %190 : vector<1x128xf32> to vector<64x128xf32>
    %192 = arith.addf %189, %191 : vector<64x128xf32>
    %c0_72 = arith.constant 0 : index
    %c0_73 = arith.constant 0 : index
    %193 = vector.load %arg12[%c0_72, %c0_73] : memref<64x128xf32, #tpu.memory_space<vmem>>, vector<64x128xf32>
    tpu.vector_store %arg12[%c0_72, %c0_73], %192 {strides = array<i32>} : memref<64x128xf32, #tpu.memory_space<vmem>>, vector<64x128xf32>,
    %c0_74 = arith.constant 0 : index
    %c0_75 = arith.constant 0 : index
    %194 = vector.load %arg5[%c0_74, %c0_75] : memref<32x128xbf16, #tpu.memory_space<vmem>>, vector<32x128xbf16>
    %c0_76 = arith.constant 0 : index
    %c0_77 = arith.constant 0 : index
    %195 = vector.load %arg12[%c0_76, %c0_77] : memref<64x128xf32, #tpu.memory_space<vmem>>, vector<8x128xf32>
    %196 = arith.negf %195 : vector<8x128xf32>
    %197 = math.exp %196 : vector<8x128xf32>
    %cst_78 = arith.constant 1.000000e+00 : f32
    %198 = vector.broadcast %cst_78 : f32 to vector<8x128xf32>
    %199 = arith.addf %198, %197 : vector<8x128xf32>
    %200 = arith.divf %198, %199 : vector<8x128xf32>
    %201 = vector.extract_strided_slice %200 {offsets = [0, 0], sizes = [8, 32], strides = [1, 1]} : vector<8x128xf32> to vector<8x32xf32>
    %202 = vector.extract_strided_slice %200 {offsets = [0, 64], sizes = [8, 32], strides = [1, 1]} : vector<8x128xf32> to vector<8x32xf32>
    %cst_79 = arith.constant 2.000000e+00 : f32
    %203 = vector.broadcast %cst_79 : f32 to vector<8x32xf32>
    %204 = arith.mulf %203, %202 : vector<8x32xf32>
    %cst_80 = arith.constant 1.000000e+00 : f32
    %205 = vector.broadcast %cst_80 : f32 to vector<8x32xf32>
    %206 = arith.subf %204, %205 : vector<8x32xf32>
    %207 = vector.extract_strided_slice %200 {offsets = [0, 96], sizes = [8, 32], strides = [1, 1]} : vector<8x128xf32> to vector<8x32xf32>
    %208 = arith.mulf %201, %206 : vector<8x32xf32>
    %209 = math.tanh %208 : vector<8x32xf32>
    %210 = arith.mulf %207, %209 : vector<8x32xf32>
    %211 = vector.extract_strided_slice %210 {offsets = [7, 0], sizes = [1, 32], strides = [1, 1]} : vector<8x32xf32> to vector<1x32xf32>
    %c0_81 = arith.constant 0 : index
    %c0_82 = arith.constant 0 : index
    %212 = vector.load %arg14[%c0_81, %c0_82] : memref<8x32xf32, #tpu.memory_space<vmem>>, vector<1x32xf32>
    tpu.vector_store %arg14[%c0_81, %c0_82], %211 {strides = array<i32>} : memref<8x32xf32, #tpu.memory_space<vmem>>, vector<1x32xf32>,
    %c8_83 = arith.constant 8 : index
    %c0_84 = arith.constant 0 : index
    %213 = vector.load %arg12[%c8_83, %c0_84] : memref<64x128xf32, #tpu.memory_space<vmem>>, vector<8x128xf32>
    %214 = arith.truncf %210 : vector<8x32xf32> to vector<8x32xbf16>
    %cst_85 = arith.constant dense<0.000000e+00> : vector<8x128xf32>
    %215 = tpu.matmul %214, %194, %cst_85 {dimension_numbers = #tpu.dot_dimension_numbers<[1], [0], [0], [1], [0, 0, 1, 1], [], []>} : vector<8x32xbf16>, vector<32x128xbf16>, vector<8x128xf32> -> vector<8x128xf32>
    %216 = arith.addf %213, %215 : vector<8x128xf32>
    %217 = arith.negf %216 : vector<8x128xf32>
    %218 = math.exp %217 : vector<8x128xf32>
    %cst_86 = arith.constant 1.000000e+00 : f32
    %219 = vector.broadcast %cst_86 : f32 to vector<8x128xf32>
    %220 = arith.addf %219, %218 : vector<8x128xf32>
    %221 = arith.divf %219, %220 : vector<8x128xf32>
    %222 = vector.extract_strided_slice %221 {offsets = [0, 0], sizes = [8, 32], strides = [1, 1]} : vector<8x128xf32> to vector<8x32xf32>
    %223 = vector.extract_strided_slice %221 {offsets = [0, 32], sizes = [8, 32], strides = [1, 1]} : vector<8x128xf32> to vector<8x32xf32>
    %224 = vector.extract_strided_slice %221 {offsets = [0, 64], sizes = [8, 32], strides = [1, 1]} : vector<8x128xf32> to vector<8x32xf32>
    %cst_87 = arith.constant 2.000000e+00 : f32
    %225 = vector.broadcast %cst_87 : f32 to vector<8x32xf32>
    %226 = arith.mulf %225, %224 : vector<8x32xf32>
    %cst_88 = arith.constant 1.000000e+00 : f32
    %227 = vector.broadcast %cst_88 : f32 to vector<8x32xf32>
    %228 = arith.subf %226, %227 : vector<8x32xf32>
    %229 = vector.extract_strided_slice %221 {offsets = [0, 96], sizes = [8, 32], strides = [1, 1]} : vector<8x128xf32> to vector<8x32xf32>
    %230 = arith.mulf %223, %208 : vector<8x32xf32>
    %231 = arith.mulf %222, %228 : vector<8x32xf32>
    %232 = arith.addf %230, %231 : vector<8x32xf32>
    %233 = math.tanh %232 : vector<8x32xf32>
    %234 = arith.mulf %229, %233 : vector<8x32xf32>
    %235 = vector.extract_strided_slice %234 {offsets = [7, 0], sizes = [1, 32], strides = [1, 1]} : vector<8x32xf32> to vector<1x32xf32>
    %c1 = arith.constant 1 : index
    %c0_89 = arith.constant 0 : index
    %236 = vector.load %arg14[%c1, %c0_89] : memref<8x32xf32, #tpu.memory_space<vmem>>, vector<1x32xf32>
    tpu.vector_store %arg14[%c1, %c0_89], %235 {strides = array<i32>} : memref<8x32xf32, #tpu.memory_space<vmem>>, vector<1x32xf32>,
    %c16_90 = arith.constant 16 : index
    %c0_91 = arith.constant 0 : index
    %237 = vector.load %arg12[%c16_90, %c0_91] : memref<64x128xf32, #tpu.memory_space<vmem>>, vector<8x128xf32>
    %238 = arith.truncf %234 : vector<8x32xf32> to vector<8x32xbf16>
    %cst_92 = arith.constant dense<0.000000e+00> : vector<8x128xf32>
    %239 = tpu.matmul %238, %194, %cst_92 {dimension_numbers = #tpu.dot_dimension_numbers<[1], [0], [0], [1], [0, 0, 1, 1], [], []>} : vector<8x32xbf16>, vector<32x128xbf16>, vector<8x128xf32> -> vector<8x128xf32>
    %240 = arith.addf %237, %239 : vector<8x128xf32>
    %241 = arith.negf %240 : vector<8x128xf32>
    %242 = math.exp %241 : vector<8x128xf32>
    %cst_93 = arith.constant 1.000000e+00 : f32
    %243 = vector.broadcast %cst_93 : f32 to vector<8x128xf32>
    %244 = arith.addf %243, %242 : vector<8x128xf32>
    %245 = arith.divf %243, %244 : vector<8x128xf32>
    %246 = vector.extract_strided_slice %245 {offsets = [0, 0], sizes = [8, 32], strides = [1, 1]} : vector<8x128xf32> to vector<8x32xf32>
    %247 = vector.extract_strided_slice %245 {offsets = [0, 32], sizes = [8, 32], strides = [1, 1]} : vector<8x128xf32> to vector<8x32xf32>
    %248 = vector.extract_strided_slice %245 {offsets = [0, 64], sizes = [8, 32], strides = [1, 1]} : vector<8x128xf32> to vector<8x32xf32>
    %cst_94 = arith.constant 2.000000e+00 : f32
    %249 = vector.broadcast %cst_94 : f32 to vector<8x32xf32>
    %250 = arith.mulf %249, %248 : vector<8x32xf32>
    %cst_95 = arith.constant 1.000000e+00 : f32
    %251 = vector.broadcast %cst_95 : f32 to vector<8x32xf32>
    %252 = arith.subf %250, %251 : vector<8x32xf32>
    %253 = vector.extract_strided_slice %245 {offsets = [0, 96], sizes = [8, 32], strides = [1, 1]} : vector<8x128xf32> to vector<8x32xf32>
    %254 = arith.mulf %247, %232 : vector<8x32xf32>
    %255 = arith.mulf %246, %252 : vector<8x32xf32>
    %256 = arith.addf %254, %255 : vector<8x32xf32>
    %257 = math.tanh %256 : vector<8x32xf32>
    %258 = arith.mulf %253, %257 : vector<8x32xf32>
    %259 = vector.extract_strided_slice %258 {offsets = [7, 0], sizes = [1, 32], strides = [1, 1]} : vector<8x32xf32> to vector<1x32xf32>
    %c2 = arith.constant 2 : index
    %c0_96 = arith.constant 0 : index
    %260 = vector.load %arg14[%c2, %c0_96] : memref<8x32xf32, #tpu.memory_space<vmem>>, vector<1x32xf32>
    tpu.vector_store %arg14[%c2, %c0_96], %259 {strides = array<i32>} : memref<8x32xf32, #tpu.memory_space<vmem>>, vector<1x32xf32>,
    %c24_97 = arith.constant 24 : index
    %c0_98 = arith.constant 0 : index
    %261 = vector.load %arg12[%c24_97, %c0_98] : memref<64x128xf32, #tpu.memory_space<vmem>>, vector<8x128xf32>
    %262 = arith.truncf %258 : vector<8x32xf32> to vector<8x32xbf16>
    %cst_99 = arith.constant dense<0.000000e+00> : vector<8x128xf32>
    %263 = tpu.matmul %262, %194, %cst_99 {dimension_numbers = #tpu.dot_dimension_numbers<[1], [0], [0], [1], [0, 0, 1, 1], [], []>} : vector<8x32xbf16>, vector<32x128xbf16>, vector<8x128xf32> -> vector<8x128xf32>
    %264 = arith.addf %261, %263 : vector<8x128xf32>
    %265 = arith.negf %264 : vector<8x128xf32>
    %266 = math.exp %265 : vector<8x128xf32>
    %cst_100 = arith.constant 1.000000e+00 : f32
    %267 = vector.broadcast %cst_100 : f32 to vector<8x128xf32>
    %268 = arith.addf %267, %266 : vector<8x128xf32>
    %269 = arith.divf %267, %268 : vector<8x128xf32>
    %270 = vector.extract_strided_slice %269 {offsets = [0, 0], sizes = [8, 32], strides = [1, 1]} : vector<8x128xf32> to vector<8x32xf32>
    %271 = vector.extract_strided_slice %269 {offsets = [0, 32], sizes = [8, 32], strides = [1, 1]} : vector<8x128xf32> to vector<8x32xf32>
    %272 = vector.extract_strided_slice %269 {offsets = [0, 64], sizes = [8, 32], strides = [1, 1]} : vector<8x128xf32> to vector<8x32xf32>
    %cst_101 = arith.constant 2.000000e+00 : f32
    %273 = vector.broadcast %cst_101 : f32 to vector<8x32xf32>
    %274 = arith.mulf %273, %272 : vector<8x32xf32>
    %cst_102 = arith.constant 1.000000e+00 : f32
    %275 = vector.broadcast %cst_102 : f32 to vector<8x32xf32>
    %276 = arith.subf %274, %275 : vector<8x32xf32>
    %277 = vector.extract_strided_slice %269 {offsets = [0, 96], sizes = [8, 32], strides = [1, 1]} : vector<8x128xf32> to vector<8x32xf32>
    %278 = arith.mulf %271, %256 : vector<8x32xf32>
    %279 = arith.mulf %270, %276 : vector<8x32xf32>
    %280 = arith.addf %278, %279 : vector<8x32xf32>
    %281 = math.tanh %280 : vector<8x32xf32>
    %282 = arith.mulf %277, %281 : vector<8x32xf32>
    %283 = vector.extract_strided_slice %282 {offsets = [7, 0], sizes = [1, 32], strides = [1, 1]} : vector<8x32xf32> to vector<1x32xf32>
    %c3 = arith.constant 3 : index
    %c0_103 = arith.constant 0 : index
    %284 = vector.load %arg14[%c3, %c0_103] : memref<8x32xf32, #tpu.memory_space<vmem>>, vector<1x32xf32>
    tpu.vector_store %arg14[%c3, %c0_103], %283 {strides = array<i32>} : memref<8x32xf32, #tpu.memory_space<vmem>>, vector<1x32xf32>,
    %c32_104 = arith.constant 32 : index
    %c0_105 = arith.constant 0 : index
    %285 = vector.load %arg12[%c32_104, %c0_105] : memref<64x128xf32, #tpu.memory_space<vmem>>, vector<8x128xf32>
    %286 = arith.truncf %282 : vector<8x32xf32> to vector<8x32xbf16>
    %cst_106 = arith.constant dense<0.000000e+00> : vector<8x128xf32>
    %287 = tpu.matmul %286, %194, %cst_106 {dimension_numbers = #tpu.dot_dimension_numbers<[1], [0], [0], [1], [0, 0, 1, 1], [], []>} : vector<8x32xbf16>, vector<32x128xbf16>, vector<8x128xf32> -> vector<8x128xf32>
    %288 = arith.addf %285, %287 : vector<8x128xf32>
    %289 = arith.negf %288 : vector<8x128xf32>
    %290 = math.exp %289 : vector<8x128xf32>
    %cst_107 = arith.constant 1.000000e+00 : f32
    %291 = vector.broadcast %cst_107 : f32 to vector<8x128xf32>
    %292 = arith.addf %291, %290 : vector<8x128xf32>
    %293 = arith.divf %291, %292 : vector<8x128xf32>
    %294 = vector.extract_strided_slice %293 {offsets = [0, 0], sizes = [8, 32], strides = [1, 1]} : vector<8x128xf32> to vector<8x32xf32>
    %295 = vector.extract_strided_slice %293 {offsets = [0, 32], sizes = [8, 32], strides = [1, 1]} : vector<8x128xf32> to vector<8x32xf32>
    %296 = vector.extract_strided_slice %293 {offsets = [0, 64], sizes = [8, 32], strides = [1, 1]} : vector<8x128xf32> to vector<8x32xf32>
    %cst_108 = arith.constant 2.000000e+00 : f32
    %297 = vector.broadcast %cst_108 : f32 to vector<8x32xf32>
    %298 = arith.mulf %297, %296 : vector<8x32xf32>
    %cst_109 = arith.constant 1.000000e+00 : f32
    %299 = vector.broadcast %cst_109 : f32 to vector<8x32xf32>
    %300 = arith.subf %298, %299 : vector<8x32xf32>
    %301 = vector.extract_strided_slice %293 {offsets = [0, 96], sizes = [8, 32], strides = [1, 1]} : vector<8x128xf32> to vector<8x32xf32>
    %302 = arith.mulf %295, %280 : vector<8x32xf32>
    %303 = arith.mulf %294, %300 : vector<8x32xf32>
    %304 = arith.addf %302, %303 : vector<8x32xf32>
    %305 = math.tanh %304 : vector<8x32xf32>
    %306 = arith.mulf %301, %305 : vector<8x32xf32>
    %307 = vector.extract_strided_slice %306 {offsets = [7, 0], sizes = [1, 32], strides = [1, 1]} : vector<8x32xf32> to vector<1x32xf32>
    %c4 = arith.constant 4 : index
    %c0_110 = arith.constant 0 : index
    %308 = vector.load %arg14[%c4, %c0_110] : memref<8x32xf32, #tpu.memory_space<vmem>>, vector<1x32xf32>
    tpu.vector_store %arg14[%c4, %c0_110], %307 {strides = array<i32>} : memref<8x32xf32, #tpu.memory_space<vmem>>, vector<1x32xf32>,
    %c40_111 = arith.constant 40 : index
    %c0_112 = arith.constant 0 : index
    %309 = vector.load %arg12[%c40_111, %c0_112] : memref<64x128xf32, #tpu.memory_space<vmem>>, vector<8x128xf32>
    %310 = arith.truncf %306 : vector<8x32xf32> to vector<8x32xbf16>
    %cst_113 = arith.constant dense<0.000000e+00> : vector<8x128xf32>
    %311 = tpu.matmul %310, %194, %cst_113 {dimension_numbers = #tpu.dot_dimension_numbers<[1], [0], [0], [1], [0, 0, 1, 1], [], []>} : vector<8x32xbf16>, vector<32x128xbf16>, vector<8x128xf32> -> vector<8x128xf32>
    %312 = arith.addf %309, %311 : vector<8x128xf32>
    %313 = arith.negf %312 : vector<8x128xf32>
    %314 = math.exp %313 : vector<8x128xf32>
    %cst_114 = arith.constant 1.000000e+00 : f32
    %315 = vector.broadcast %cst_114 : f32 to vector<8x128xf32>
    %316 = arith.addf %315, %314 : vector<8x128xf32>
    %317 = arith.divf %315, %316 : vector<8x128xf32>
    %318 = vector.extract_strided_slice %317 {offsets = [0, 0], sizes = [8, 32], strides = [1, 1]} : vector<8x128xf32> to vector<8x32xf32>
    %319 = vector.extract_strided_slice %317 {offsets = [0, 32], sizes = [8, 32], strides = [1, 1]} : vector<8x128xf32> to vector<8x32xf32>
    %320 = vector.extract_strided_slice %317 {offsets = [0, 64], sizes = [8, 32], strides = [1, 1]} : vector<8x128xf32> to vector<8x32xf32>
    %cst_115 = arith.constant 2.000000e+00 : f32
    %321 = vector.broadcast %cst_115 : f32 to vector<8x32xf32>
    %322 = arith.mulf %321, %320 : vector<8x32xf32>
    %cst_116 = arith.constant 1.000000e+00 : f32
    %323 = vector.broadcast %cst_116 : f32 to vector<8x32xf32>
    %324 = arith.subf %322, %323 : vector<8x32xf32>
    %325 = vector.extract_strided_slice %317 {offsets = [0, 96], sizes = [8, 32], strides = [1, 1]} : vector<8x128xf32> to vector<8x32xf32>
    %326 = arith.mulf %319, %304 : vector<8x32xf32>
    %327 = arith.mulf %318, %324 : vector<8x32xf32>
    %328 = arith.addf %326, %327 : vector<8x32xf32>
    %329 = math.tanh %328 : vector<8x32xf32>
    %330 = arith.mulf %325, %329 : vector<8x32xf32>
    %331 = vector.extract_strided_slice %330 {offsets = [7, 0], sizes = [1, 32], strides = [1, 1]} : vector<8x32xf32> to vector<1x32xf32>
    %c5 = arith.constant 5 : index
    %c0_117 = arith.constant 0 : index
    %332 = vector.load %arg14[%c5, %c0_117] : memref<8x32xf32, #tpu.memory_space<vmem>>, vector<1x32xf32>
    tpu.vector_store %arg14[%c5, %c0_117], %331 {strides = array<i32>} : memref<8x32xf32, #tpu.memory_space<vmem>>, vector<1x32xf32>,
    %c48_118 = arith.constant 48 : index
    %c0_119 = arith.constant 0 : index
    %333 = vector.load %arg12[%c48_118, %c0_119] : memref<64x128xf32, #tpu.memory_space<vmem>>, vector<8x128xf32>
    %334 = arith.truncf %330 : vector<8x32xf32> to vector<8x32xbf16>
    %cst_120 = arith.constant dense<0.000000e+00> : vector<8x128xf32>
    %335 = tpu.matmul %334, %194, %cst_120 {dimension_numbers = #tpu.dot_dimension_numbers<[1], [0], [0], [1], [0, 0, 1, 1], [], []>} : vector<8x32xbf16>, vector<32x128xbf16>, vector<8x128xf32> -> vector<8x128xf32>
    %336 = arith.addf %333, %335 : vector<8x128xf32>
    %337 = arith.negf %336 : vector<8x128xf32>
    %338 = math.exp %337 : vector<8x128xf32>
    %cst_121 = arith.constant 1.000000e+00 : f32
    %339 = vector.broadcast %cst_121 : f32 to vector<8x128xf32>
    %340 = arith.addf %339, %338 : vector<8x128xf32>
    %341 = arith.divf %339, %340 : vector<8x128xf32>
    %342 = vector.extract_strided_slice %341 {offsets = [0, 0], sizes = [8, 32], strides = [1, 1]} : vector<8x128xf32> to vector<8x32xf32>
    %343 = vector.extract_strided_slice %341 {offsets = [0, 32], sizes = [8, 32], strides = [1, 1]} : vector<8x128xf32> to vector<8x32xf32>
    %344 = vector.extract_strided_slice %341 {offsets = [0, 64], sizes = [8, 32], strides = [1, 1]} : vector<8x128xf32> to vector<8x32xf32>
    %cst_122 = arith.constant 2.000000e+00 : f32
    %345 = vector.broadcast %cst_122 : f32 to vector<8x32xf32>
    %346 = arith.mulf %345, %344 : vector<8x32xf32>
    %cst_123 = arith.constant 1.000000e+00 : f32
    %347 = vector.broadcast %cst_123 : f32 to vector<8x32xf32>
    %348 = arith.subf %346, %347 : vector<8x32xf32>
    %349 = vector.extract_strided_slice %341 {offsets = [0, 96], sizes = [8, 32], strides = [1, 1]} : vector<8x128xf32> to vector<8x32xf32>
    %350 = arith.mulf %343, %328 : vector<8x32xf32>
    %351 = arith.mulf %342, %348 : vector<8x32xf32>
    %352 = arith.addf %350, %351 : vector<8x32xf32>
    %353 = math.tanh %352 : vector<8x32xf32>
    %354 = arith.mulf %349, %353 : vector<8x32xf32>
    %355 = vector.extract_strided_slice %354 {offsets = [7, 0], sizes = [1, 32], strides = [1, 1]} : vector<8x32xf32> to vector<1x32xf32>
    %c6 = arith.constant 6 : index
    %c0_124 = arith.constant 0 : index
    %356 = vector.load %arg14[%c6, %c0_124] : memref<8x32xf32, #tpu.memory_space<vmem>>, vector<1x32xf32>
    tpu.vector_store %arg14[%c6, %c0_124], %355 {strides = array<i32>} : memref<8x32xf32, #tpu.memory_space<vmem>>, vector<1x32xf32>,
    %c56_125 = arith.constant 56 : index
    %c0_126 = arith.constant 0 : index
    %357 = vector.load %arg12[%c56_125, %c0_126] : memref<64x128xf32, #tpu.memory_space<vmem>>, vector<8x128xf32>
    %358 = arith.truncf %354 : vector<8x32xf32> to vector<8x32xbf16>
    %cst_127 = arith.constant dense<0.000000e+00> : vector<8x128xf32>
    %359 = tpu.matmul %358, %194, %cst_127 {dimension_numbers = #tpu.dot_dimension_numbers<[1], [0], [0], [1], [0, 0, 1, 1], [], []>} : vector<8x32xbf16>, vector<32x128xbf16>, vector<8x128xf32> -> vector<8x128xf32>
    %360 = arith.addf %357, %359 : vector<8x128xf32>
    %361 = arith.negf %360 : vector<8x128xf32>
    %362 = math.exp %361 : vector<8x128xf32>
    %cst_128 = arith.constant 1.000000e+00 : f32
    %363 = vector.broadcast %cst_128 : f32 to vector<8x128xf32>
    %364 = arith.addf %363, %362 : vector<8x128xf32>
    %365 = arith.divf %363, %364 : vector<8x128xf32>
    %366 = vector.extract_strided_slice %365 {offsets = [0, 0], sizes = [8, 32], strides = [1, 1]} : vector<8x128xf32> to vector<8x32xf32>
    %367 = vector.extract_strided_slice %365 {offsets = [0, 32], sizes = [8, 32], strides = [1, 1]} : vector<8x128xf32> to vector<8x32xf32>
    %368 = vector.extract_strided_slice %365 {offsets = [0, 64], sizes = [8, 32], strides = [1, 1]} : vector<8x128xf32> to vector<8x32xf32>
    %cst_129 = arith.constant 2.000000e+00 : f32
    %369 = vector.broadcast %cst_129 : f32 to vector<8x32xf32>
    %370 = arith.mulf %369, %368 : vector<8x32xf32>
    %cst_130 = arith.constant 1.000000e+00 : f32
    %371 = vector.broadcast %cst_130 : f32 to vector<8x32xf32>
    %372 = arith.subf %370, %371 : vector<8x32xf32>
    %373 = vector.extract_strided_slice %365 {offsets = [0, 96], sizes = [8, 32], strides = [1, 1]} : vector<8x128xf32> to vector<8x32xf32>
    %374 = arith.mulf %367, %352 : vector<8x32xf32>
    %375 = arith.mulf %366, %372 : vector<8x32xf32>
    %376 = arith.addf %374, %375 : vector<8x32xf32>
    %377 = math.tanh %376 : vector<8x32xf32>
    %378 = arith.mulf %373, %377 : vector<8x32xf32>
    %379 = vector.extract_strided_slice %378 {offsets = [7, 0], sizes = [1, 32], strides = [1, 1]} : vector<8x32xf32> to vector<1x32xf32>
    %c7 = arith.constant 7 : index
    %c0_131 = arith.constant 0 : index
    %380 = vector.load %arg14[%c7, %c0_131] : memref<8x32xf32, #tpu.memory_space<vmem>>, vector<1x32xf32>
    tpu.vector_store %arg14[%c7, %c0_131], %379 {strides = array<i32>} : memref<8x32xf32, #tpu.memory_space<vmem>>, vector<1x32xf32>,
    %c0_132 = arith.constant 0 : index
    %c0_133 = arith.constant 0 : index
    %381 = vector.load %arg14[%c0_132, %c0_133] : memref<8x32xf32, #tpu.memory_space<vmem>>, vector<8x32xf32>
    %cst_134 = arith.constant dense<0.000000e+00> : vector<32xf32>
    %382 = vector.multi_reduction <add>, %381, %cst_134 [0] : vector<8x32xf32> to vector<32xf32>
    %383 = vector.shape_cast %382 : vector<32xf32> to vector<1x32xf32>
    %cst_135 = arith.constant 8.000000e+00 : f32
    %384 = vector.broadcast %cst_135 : f32 to vector<1x32xf32>
    %385 = arith.divf %383, %384 : vector<1x32xf32>
    %386 = vector.broadcast %385 : vector<1x32xf32> to vector<8x32xf32>
    %387 = arith.subf %381, %386 : vector<8x32xf32>
    %388 = arith.mulf %387, %387 : vector<8x32xf32>
    %cst_136 = arith.constant dense<0.000000e+00> : vector<32xf32>
    %389 = vector.multi_reduction <add>, %388, %cst_136 [0] : vector<8x32xf32> to vector<32xf32>
    %390 = vector.shape_cast %389 : vector<32xf32> to vector<1x32xf32>
    %cst_137 = arith.constant 8.000000e+00 : f32
    %391 = vector.broadcast %cst_137 : f32 to vector<1x32xf32>
    %392 = arith.divf %390, %391 : vector<1x32xf32>
    %393 = vector.broadcast %385 : vector<1x32xf32> to vector<8x32xf32>
    %394 = arith.subf %381, %393 : vector<8x32xf32>
    %cst_138 = arith.constant 9.99999974E-6 : f32
    %395 = vector.broadcast %cst_138 : f32 to vector<1x32xf32>
    %396 = arith.addf %392, %395 : vector<1x32xf32>
    %397 = math.rsqrt %396 : vector<1x32xf32>
    %398 = vector.broadcast %397 : vector<1x32xf32> to vector<8x32xf32>
    %399 = arith.mulf %394, %398 : vector<8x32xf32>
    %c0_139 = arith.constant 0 : index
    %c0_140 = arith.constant 0 : index
    %400 = vector.load %arg7[%c0_139, %c0_140] : memref<1x32xf32, #tpu.memory_space<vmem>>, vector<1x32xf32>
    %401 = vector.broadcast %400 : vector<1x32xf32> to vector<8x32xf32>
    %402 = arith.mulf %399, %401 : vector<8x32xf32>
    %c0_141 = arith.constant 0 : index
    %c0_142 = arith.constant 0 : index
    %403 = vector.load %arg8[%c0_141, %c0_142] : memref<1x32xf32, #tpu.memory_space<vmem>>, vector<1x32xf32>
    %404 = vector.broadcast %403 : vector<1x32xf32> to vector<8x32xf32>
    %405 = arith.addf %402, %404 : vector<8x32xf32>
    %c0_143 = arith.constant 0 : index
    %c0_144 = arith.constant 0 : index
    %406 = vector.load %arg9[%c0_143, %c0_144] : memref<32x128xf32, #tpu.memory_space<vmem>>, vector<32x128xf32>
    %cst_145 = arith.constant dense<0.000000e+00> : vector<8x128xf32>
    %407 = tpu.matmul %405, %406, %cst_145 {dimension_numbers = #tpu.dot_dimension_numbers<[1], [0], [0], [1], [0, 0, 1, 1], [], []>} : vector<8x32xf32>, vector<32x128xf32>, vector<8x128xf32> -> vector<8x128xf32>
    %c0_146 = arith.constant 0 : index
    %c0_147 = arith.constant 0 : index
    %408 = vector.load %arg10[%c0_146, %c0_147] : memref<1x128xf32, #tpu.memory_space<vmem>>, vector<1x128xf32>
    %409 = vector.broadcast %408 : vector<1x128xf32> to vector<8x128xf32>
    %410 = arith.addf %407, %409 : vector<8x128xf32>
    %c0_148 = arith.constant 0 : index
    %c0_149 = arith.constant 0 : index
    %411 = vector.load %arg11[%c0_148, %c0_149] : memref<8x128xf32, #tpu.memory_space<vmem>>, vector<8x128xf32>
    tpu.vector_store %arg11[%c0_148, %c0_149], %410 {strides = array<i32>} : memref<8x128xf32, #tpu.memory_space<vmem>>, vector<8x128xf32>,
    return
  }
}

</mosaic_0001>

<llo_original>
// kernel: tpu_custom_call.1
$region0: #{tpu_custom_call.1}
  #allocation0 [shape = 'u32[]', space=smem, size = 0x4, offset = 0x4, fixed_abs, tag = 'smem constant byte address 0x4 - core index']
  #allocation1 [shape = 'u32[144,128]{1,0:T(1,128)}', space=vmem, size = 0x12000, scoped, tag = 'internal scratch']
  #allocation2 [shape = 'f32[64,128]{1,0:T(8,128)}', space=vmem, size = 0x8000, scoped, tag = 'scratch operand']
  #allocation3 [shape = 'f32[64,32]{1,0:T(8,128)}', space=vmem, size = 0x8000, scoped, tag = 'scratch operand']
  #allocation4 [shape = 'f32[8,32]{1,0:T(8,128)}', space=vmem, size = 0x1000, scoped, tag = 'scratch operand']
  %s0 = inlined_call_operand.vmem [shape: bf16[64,16], index: 0, kind: input, shape index: {}]
  %s1 = inlined_call_operand.vmem [shape: bf16[16,128], index: 1, kind: input, shape index: {}]
  %s2 = inlined_call_operand.vmem [shape: bf16[32,128], index: 2, kind: input, shape index: {}]
  %s3 = inlined_call_operand.vmem [shape: f32[1,128], index: 3, kind: input, shape index: {}]
  %s4 = inlined_call_operand.hbm [shape: bf16[32,128], index: 4, kind: input, shape index: {}]
  %s5 = inlined_call_operand.hbm [shape: bf16[32,128], index: 5, kind: input, shape index: {}]
  %s6 = inlined_call_operand.vmem [shape: f32[1,128], index: 6, kind: input, shape index: {}]
  %s7 = inlined_call_operand.vmem [shape: f32[1,32], index: 7, kind: input, shape index: {}]
  %s8 = inlined_call_operand.vmem [shape: f32[1,32], index: 8, kind: input, shape index: {}]
  %s9 = inlined_call_operand.vmem [shape: f32[32,128], index: 9, kind: input, shape index: {}]
  %s10 = inlined_call_operand.vmem [shape: f32[1,128], index: 10, kind: input, shape index: {}]
  %s11 = inlined_call_operand.hbm [shape: f32[8,128], index: 11, kind: output, shape index: {}]
  %s12 = sld [smem:[#allocation0]]
  $region62: #{tpu_custom_call.1} parent=0
    _
  %s14 = ssub.s32 1, %s12
  %s15 = scalar_select 0, %s14, %s12
  $region1: #{tpu_custom_call.1} parent=0
    #allocation5 [shape = 'u8[8192]{0}', space=vmem, size = 0x2000, scoped, tag = 'input window, operand 4, single buffered']
    #allocation6 [shape = 's32[1]{0}', space=sflag, size = 0x4, scoped, tag = 'scoped memory for tpu_custom_call.1']
    #allocation7 [shape = 's32[1]{0}', space=sflag, size = 0x4, scoped, tag = 'scoped memory for tpu_custom_call.1']
    #allocation8 [shape = 'u8[8192]{0}', space=vmem, size = 0x2000, scoped, tag = 'input window, operand 5, single buffered']
    #allocation9 [shape = 's32[1]{0}', space=sflag, size = 0x4, scoped, tag = 'scoped memory for tpu_custom_call.1']
    #allocation10 [shape = 'u8[4096]{0}', space=vmem, size = 0x1000, scoped, tag = 'output window, operand 0, single buffered']
    %16 = vsyncpa [#allocation6], 0
    %17 = vsyncpa [#allocation9], 0
    %18 = vsyncpa [#allocation7], 0
    // Predicated region
    $region2: #{tpu_custom_call.1} parent=1 // pred_check
      _
    $region3: #{tpu_custom_call.1} parent=1 // pred_check_branch
      %20 = sbr.rel (0) target = $region5
    $region4: #{tpu_custom_call.1} parent=1 // pred_region
      _
    $region5: #{tpu_custom_call.1} parent=1 // pred_fallthru
      _
    // Predicated region
    $region6: #{tpu_custom_call.1} parent=1 // pred_check
      _
    $region7: #{tpu_custom_call.1} parent=1 // pred_check_branch
      %22 = sbr.rel (0) target = $region9
    $region8: #{tpu_custom_call.1} parent=1 // pred_region
      _
    $region9: #{tpu_custom_call.1} parent=1 // pred_fallthru
      _
    // Predicated region
    $region10: #{tpu_custom_call.1} parent=1 // pred_check
      _
    $region11: #{tpu_custom_call.1} parent=1 // pred_check_branch
      %24 = sbr.rel (0) target = $region13
    $region12: #{tpu_custom_call.1} parent=1 // pred_region
      _
    $region13: #{tpu_custom_call.1} parent=1 // pred_fallthru
      _
    // Predicated region
    $region14: #{tpu_custom_call.1} parent=1 // pred_check
      _
    $region15: #{tpu_custom_call.1} parent=1 // pred_check_branch
      %26 = sbr.rel (0) target = $region17
    $region16: #{tpu_custom_call.1} parent=1 // pred_region
      _
    $region17: #{tpu_custom_call.1} parent=1 // pred_fallthru
      _
    // Predicated region
    $region18: #{tpu_custom_call.1} parent=1 // pred_check
      _
    $region19: #{tpu_custom_call.1} parent=1 // pred_check_branch
      %28 = sbr.rel (0) target = $region21
    $region20: #{tpu_custom_call.1} parent=1 // pred_region
      %s30 = ssub.s32 256, 256
      %31 = vsyncadd [#allocation6], %s30
      %s32 = sshll.u32 [#allocation5], 4
      %s33 = int_to_ptr.vmem [resolvable:$true] %s32
      %38 = dma.hbm_to_vmem [thread:$0]  %s4, 256, %s33, [#allocation6], 64, 64, 4
    $region21: #{tpu_custom_call.1} parent=1 // pred_fallthru
      _
    // Predicated region
    $region22: #{tpu_custom_call.1} parent=1 // pred_check
      _
    $region23: #{tpu_custom_call.1} parent=1 // pred_check_branch
      %40 = sbr.rel (0) target = $region25
    $region24: #{tpu_custom_call.1} parent=1 // pred_region
      %s42 = ssub.s32 256, 256
      %43 = vsyncadd [#allocation9], %s42
      %s44 = sshll.u32 [#allocation8], 4
      %s45 = int_to_ptr.vmem [resolvable:$true] %s44
      %50 = dma.hbm_to_vmem [thread:$0]  %s5, 256, %s45, [#allocation9], 64, 64, 4
    $region25: #{tpu_custom_call.1} parent=1 // pred_fallthru
      _
    // Predicated region
    $region26: #{tpu_custom_call.1} parent=1 // pred_check
      _
    $region27: #{tpu_custom_call.1} parent=1 // pred_check_branch
      %52 = sbr.rel (0) target = $region29
    $region28: #{tpu_custom_call.1} parent=1 // pred_region
      _
    $region29: #{tpu_custom_call.1} parent=1 // pred_fallthru
      _
    // Predicated region
    $region30: #{tpu_custom_call.1} parent=1 // pred_check
      _
    $region31: #{tpu_custom_call.1} parent=1 // pred_check_branch
      %54 = sbr.rel (0) target = $region33
    $region32: #{tpu_custom_call.1} parent=1 // pred_region
      _
    $region33: #{tpu_custom_call.1} parent=1 // pred_fallthru
      _
    // Predicated region
    $region34: #{tpu_custom_call.1} parent=1 // pred_check
      _
    $region35: #{tpu_custom_call.1} parent=1 // pred_check_branch
      %56 = sbr.rel (0) target = $region37
    $region36: #{tpu_custom_call.1} parent=1 // pred_region
      _
    $region37: #{tpu_custom_call.1} parent=1 // pred_fallthru
      _
    // Predicated region
    $region38: #{tpu_custom_call.1} parent=1 // pred_check
      _
    $region39: #{tpu_custom_call.1} parent=1 // pred_check_branch
      %58 = sbr.rel (0) target = $region41
    $region40: #{tpu_custom_call.1} parent=1 // pred_region
      _
    $region41: #{tpu_custom_call.1} parent=1 // pred_fallthru
      _
    // Predicated region
    $region42: #{tpu_custom_call.1} parent=1 // pred_check
      _
    $region43: #{tpu_custom_call.1} parent=1 // pred_check_branch
      %60 = sbr.rel (0) target = $region45
    $region44: #{tpu_custom_call.1} parent=1 // pred_region
      _
    $region45: #{tpu_custom_call.1} parent=1 // pred_fallthru
      _
    // Predicated region
    $region46: #{tpu_custom_call.1} parent=1 // pred_check
      _
    $region47: #{tpu_custom_call.1} parent=1 // pred_check_branch
      %62 = sbr.rel (0) target = $region49
    $region48: #{tpu_custom_call.1} parent=1 // pred_region
      %63 = dma.done [#allocation6], 256
    $region49: #{tpu_custom_call.1} parent=1 // pred_fallthru
      _
    // Predicated region
    $region50: #{tpu_custom_call.1} parent=1 // pred_check
      _
    $region51: #{tpu_custom_call.1} parent=1 // pred_check_branch
      %65 = sbr.rel (0) target = $region53
    $region52: #{tpu_custom_call.1} parent=1 // pred_region
      %66 = dma.done [#allocation9], 256
    $region53: #{tpu_custom_call.1} parent=1 // pred_fallthru
      _
    %v68 = vld [vmem:[%s0] sm:$0xf]
    %v69 = vld [vmem:[%s0 + $0x4] sm:$0xf]
    %v70 = vld [vmem:[%s0 + $0x8] sm:$0xf]
    %v71 = vld [vmem:[%s0 + $0xc] sm:$0xf]
    %v72 = vld [vmem:[%s0 + $0x10] sm:$0xf]
    %v73 = vld [vmem:[%s0 + $0x14] sm:$0xf]
    %v74 = vld [vmem:[%s0 + $0x18] sm:$0xf]
    %v75 = vld [vmem:[%s0 + $0x1c] sm:$0xf]
    %v76 = vld [vmem:[%s1] sm:$0xf]
    %v77 = vld [vmem:[%s1 + $0x4] sm:$0xf]
    %v78 = vld [vmem:[%s3] sm:$0x1]
    %v80 = vlaneseq
    %v81 = vshrl.u32 %v80, 7
    %v82 = vsub.s32 0, %v81
    %v83 = vrot.slane %v78, %v82
    %v93 = vunpack.c.l.b16 %v68
    %v94 = vunpack.c.l.b16 %v69
    %v95 = vunpack.c.l.b16 %v70
    %v96 = vunpack.c.l.b16 %v71
    %v97 = vunpack.c.l.b16 %v72
    %v98 = vunpack.c.l.b16 %v73
    %v99 = vunpack.c.l.b16 %v74
    %v100 = vunpack.c.l.b16 %v75
    %v101 = vpack.c.b16 %v94, %v93
    %v102 = vpack.c.b16 %v96, %v95
    %v103 = vpack.c.b16 %v98, %v97
    %v104 = vpack.c.b16 %v100, %v99
    %v107 = vunpack.c.l.b16 %v76
    %v108 = vunpack.c.l.b16 %v77
    %v109 = vpack.c.b16 %v108, %v107
    %vm111 = vcmask 130048
    %v113 = vsel %vm111, %v101, 0
    %v116 = vsel %vm111, %v102, 0
    %v119 = vsel %vm111, %v103, 0
    %v122 = vsel %vm111, %v104, 0
    %124 = vmatprep.subr.bf16.mxu0 0
    %125 = vmatpush1.bf16.msra.mxu0 %v109
    %126 = vmatprep.subr.bf16.mxu0 0
    %127 = vmatpush1.bf16.msra.mxu0 0
    %128 = vmatprep.subr.bf16.mxu0 0
    %129 = vmatpush1.bf16.msra.mxu0 0
    %130 = vmatprep.subr.bf16.mxu0 0
    %131 = vmatpush1.bf16.msra.mxu0 0
    %132 = vmatprep.subr.bf16.mxu0 0
    %133 = vmatpush1.bf16.msra.mxu0 0
    %134 = vmatprep.subr.bf16.mxu0 0
    %135 = vmatpush1.bf16.msra.mxu0 0
    %136 = vmatprep.subr.bf16.mxu0 0
    %137 = vmatpush1.bf16.msra.mxu0 0
    %138 = vmatprep.subr.bf16.mxu0 0
    %139 = vmatpush1.bf16.msra.mxu0 0
    %140 = vmatprep.subr.bf16.mxu0 0
    %141 = vmatpush1.bf16.msra.mxu0 0
    %142 = vmatprep.subr.bf16.mxu0 0
    %143 = vmatpush1.bf16.msra.mxu0 0
    %144 = vmatprep.subr.bf16.mxu0 0
    %145 = vmatpush1.bf16.msra.mxu0 0
    %146 = vmatprep.subr.bf16.mxu0 0
    %147 = vmatpush1.bf16.msra.mxu0 0
    %148 = vmatprep.subr.bf16.mxu0 0
    %149 = vmatpush1.bf16.msra.mxu0 0
    %150 = vmatprep.subr.bf16.mxu0 0
    %151 = vmatpush1.bf16.msra.mxu0 0
    %152 = vmatprep.subr.bf16.mxu0 0
    %153 = vmatpush1.bf16.msra.mxu0 0
    %154 = vmatprep.subr.bf16.mxu0 0
    %155 = vmatpush1.bf16.msra.mxu0 0
    %156 = vmatprep.mubr.bf16.mxu0 0
    %157 = vmatmul.mubr.bf16.gmra.mrb[0].mxu0 %v113
    %v158 = vpop.f32.mrb[0].mxu0
    %v159 = vadd.f32 %v83, %v158
    %v160 = vpop.f32.mrb[0].mxu0
    %v161 = vpop.f32.mrb[0].mxu0
    %v162 = vadd.f32 %v83, %v161
    %v163 = vpop.f32.mrb[0].mxu0
    %164 = vmatprep.mubr.bf16.mxu0 0
    %165 = vmatmul.mubr.bf16.gmra.mrb[0].mxu0 %v116
    %v166 = vpop.f32.mrb[0].mxu0
    %v167 = vadd.f32 %v83, %v166
    %v168 = vpop.f32.mrb[0].mxu0
    %v169 = vpop.f32.mrb[0].mxu0
    %v170 = vadd.f32 %v83, %v169
    %v171 = vpop.f32.mrb[0].mxu0
    %172 = vmatprep.mubr.bf16.mxu0 0
    %173 = vmatmul.mubr.bf16.gmra.mrb[0].mxu0 %v119
    %v174 = vpop.f32.mrb[0].mxu0
    %v175 = vadd.f32 %v83, %v174
    %v176 = vpop.f32.mrb[0].mxu0
    %v177 = vpop.f32.mrb[0].mxu0
    %v178 = vadd.f32 %v83, %v177
    %v179 = vpop.f32.mrb[0].mxu0
    %180 = vmatprep.mubr.bf16.mxu0 0
    %181 = vmatmul.mubr.bf16.gmra.mrb[0].mxu0 %v122
    %v182 = vpop.f32.mrb[0].mxu0
    %v183 = vadd.f32 %v83, %v182
    %v184 = vpop.f32.mrb[0].mxu0
    %v185 = vpop.f32.mrb[0].mxu0
    %v186 = vadd.f32 %v83, %v185
    %v187 = vpop.f32.mrb[0].mxu0
    %188 = vdwg.mxu0
    %189 = vst [vmem:[#allocation2] sm:$0xff] %v159
    %190 = vst [vmem:[#allocation2 + $0x8] sm:$0xff] %v162
    %191 = vst [vmem:[#allocation2 + $0x10] sm:$0xff] %v167
    %192 = vst [vmem:[#allocation2 + $0x18] sm:$0xff] %v170
    %193 = vst [vmem:[#allocation2 + $0x20] sm:$0xff] %v175
    %194 = vst [vmem:[#allocation2 + $0x28] sm:$0xff] %v178
    %195 = vst [vmem:[#allocation2 + $0x30] sm:$0xff] %v183
    %196 = vst [vmem:[#allocation2 + $0x38] sm:$0xff] %v186
    %v197 = vld [vmem:[%s2] sm:$0xf]
    %v198 = vld [vmem:[%s2 + $0x4] sm:$0xf]
    %v199 = vld [vmem:[%s2 + $0x8] sm:$0xf]
    %v200 = vld [vmem:[%s2 + $0xc] sm:$0xf]
    %v201 = vld [vmem:[#allocation2] sm:$0xff]
    %v202 = vxor.u32 %v201, 2147483648
    %v203 = vmul.f32 %v202, 1.442695
    %v204 = vpow.pop %v203
    %v205 = vadd.f32 %v204, 1.0
    %v206 = vrcp.pop %v205
    %v207 = vmul.f32 1.0, %v206
    %v208 = vmul.f32 %v207, 2.0
    %v209 = vsub.f32 %v208, 1.0
    %211 = vrot.lane.b32.xlu0 %v209, 64
    %v212 = vpop.permute.xlu0 %211
    %v214 = vmul.f32 %v207, %v212
    %v215 = vtanh.pop %v214
    %217 = vrot.lane.b32.xlu0 %v215, 96
    %v218 = vpop.permute.xlu0 %217
    %v220 = vmul.f32 %v207, %v218
    %222 = vrot.lane.b32.xlu0 %v220, 32
    %v223 = vpop.permute.xlu0 %222
    %vm225 = vcmask 261120
    %226 = vst.msk [vmem:[#allocation3] sm:$0xff] %vm225, %v223
    %v227 = vld [vmem:[#allocation2 + $0x8] sm:$0xff]
    %v228 = vpack.c.bf16 %v220, %v220
    %230 = vrot.lane.b32.xlu0 %v228, 32
    %v231 = vpop.permute.xlu0 %230
    %v236 = vunpack.c.l.b16 %v197
    %v237 = vunpack.c.l.b16 %v198
    %v238 = vunpack.c.l.b16 %v199
    %v239 = vunpack.c.l.b16 %v200
    %v240 = vpack.c.b16 %v237, %v236
    %v241 = vpack.c.b16 %v239, %v238
    %v245 = vsel %vm225, %v231, 0
    %247 = vmatprep.subr.bf16.mxu0 0
    %248 = vmatpush1.bf16.msra.mxu0 %v240
    %249 = vmatprep.subr.bf16.mxu0 0
    %250 = vmatpush1.bf16.msra.mxu0 %v241
    %251 = vmatprep.subr.bf16.mxu0 0
    %252 = vmatpush1.bf16.msra.mxu0 0
    %253 = vmatprep.subr.bf16.mxu0 0
    %254 = vmatpush1.bf16.msra.mxu0 0
    %255 = vmatprep.subr.bf16.mxu0 0
    %256 = vmatpush1.bf16.msra.mxu0 0
    %257 = vmatprep.subr.bf16.mxu0 0
    %258 = vmatpush1.bf16.msra.mxu0 0
    %259 = vmatprep.subr.bf16.mxu0 0
    %260 = vmatpush1.bf16.msra.mxu0 0
    %261 = vmatprep.subr.bf16.mxu0 0
    %262 = vmatpush1.bf16.msra.mxu0 0
    %263 = vmatprep.subr.bf16.mxu0 0
    %264 = vmatpush1.bf16.msra.mxu0 0
    %265 = vmatprep.subr.bf16.mxu0 0
    %266 = vmatpush1.bf16.msra.mxu0 0
    %267 = vmatprep.subr.bf16.mxu0 0
    %268 = vmatpush1.bf16.msra.mxu0 0
    %269 = vmatprep.subr.bf16.mxu0 0
    %270 = vmatpush1.bf16.msra.mxu0 0
    %271 = vmatprep.subr.bf16.mxu0 0
    %272 = vmatpush1.bf16.msra.mxu0 0
    %273 = vmatprep.subr.bf16.mxu0 0
    %274 = vmatpush1.bf16.msra.mxu0 0
    %275 = vmatprep.subr.bf16.mxu0 0
    %276 = vmatpush1.bf16.msra.mxu0 0
    %277 = vmatprep.subr.bf16.mxu0 0
    %278 = vmatpush1.bf16.msra.mxu0 0
    %279 = vmatprep.mubr.bf16.mxu0 0
    %280 = vmatmul.mubr.bf16.gmra.mrb[0].mxu0 %v245
    %v281 = vpop.f32.mrb[0].mxu0
    %v282 = vadd.f32 0.0, %v281
    %v283 = vpop.f32.mrb[0].mxu0
    %v284 = vpop.f32.mrb[0].mxu0
    %v285 = vpop.f32.mrb[0].mxu0
    %286 = vdwg.mxu0
    %v287 = vadd.f32 %v227, %v282
    %v288 = vxor.u32 %v287, 2147483648
    %v289 = vmul.f32 %v288, 1.442695
    %v290 = vpow.pop %v289
    %v291 = vadd.f32 %v290, 1.0
    %v292 = vrcp.pop %v291
    %v293 = vmul.f32 1.0, %v292
    %v294 = vmul.f32 %v293, 2.0
    %v295 = vsub.f32 %v294, 1.0
    %297 = vrot.lane.b32.xlu0 %v214, 32
    %v298 = vpop.permute.xlu0 %297
    %v300 = vmul.f32 %v293, %v298
    %302 = vrot.lane.b32.xlu0 %v295, 64
    %v303 = vpop.permute.xlu0 %302
    %v305 = vmul.f32 %v293, %v303
    %307 = vrot.lane.b32.xlu0 %v305, 32
    %v308 = vpop.permute.xlu0 %307
    %v310 = vadd.f32 %v300, %v308
    %v311 = vtanh.pop %v310
    %313 = vrot.lane.b32.xlu0 %v311, 64
    %v314 = vpop.permute.xlu0 %313
    %v316 = vmul.f32 %v293, %v314
    %318 = vrot.lane.b32.xlu0 %v316, 32
    %v319 = vpop.permute.xlu0 %318
    %321 = vst.msk [vmem:[#allocation3 + $0x8] sm:$0xff] %vm225, %v319
    %v322 = vld [vmem:[#allocation2 + $0x10] sm:$0xff]
    %v323 = vpack.c.bf16 %v316, %v316
    %325 = vrot.lane.b32.xlu0 %v323, 32
    %v326 = vpop.permute.xlu0 %325
    %v328 = vsel %vm225, %v326, 0
    %330 = vmatprep.subr.bf16.mxu0 0
    %331 = vmatpush1.bf16.msra.mxu0 %v240
    %332 = vmatprep.subr.bf16.mxu0 0
    %333 = vmatpush1.bf16.msra.mxu0 %v241
    %334 = vmatprep.subr.bf16.mxu0 0
    %335 = vmatpush1.bf16.msra.mxu0 0
    %336 = vmatprep.subr.bf16.mxu0 0
    %337 = vmatpush1.bf16.msra.mxu0 0
    %338 = vmatprep.subr.bf16.mxu0 0
    %339 = vmatpush1.bf16.msra.mxu0 0
    %340 = vmatprep.subr.bf16.mxu0 0
    %341 = vmatpush1.bf16.msra.mxu0 0
    %342 = vmatprep.subr.bf16.mxu0 0
    %343 = vmatpush1.bf16.msra.mxu0 0
    %344 = vmatprep.subr.bf16.mxu0 0
    %345 = vmatpush1.bf16.msra.mxu0 0
    %346 = vmatprep.subr.bf16.mxu0 0
    %347 = vmatpush1.bf16.msra.mxu0 0
    %348 = vmatprep.subr.bf16.mxu0 0
    %349 = vmatpush1.bf16.msra.mxu0 0
    %350 = vmatprep.subr.bf16.mxu0 0
    %351 = vmatpush1.bf16.msra.mxu0 0
    %352 = vmatprep.subr.bf16.mxu0 0
    %353 = vmatpush1.bf16.msra.mxu0 0
    %354 = vmatprep.subr.bf16.mxu0 0
    %355 = vmatpush1.bf16.msra.mxu0 0
    %356 = vmatprep.subr.bf16.mxu0 0
    %357 = vmatpush1.bf16.msra.mxu0 0
    %358 = vmatprep.subr.bf16.mxu0 0
    %359 = vmatpush1.bf16.msra.mxu0 0
    %360 = vmatprep.subr.bf16.mxu0 0
    %361 = vmatpush1.bf16.msra.mxu0 0
    %362 = vmatprep.mubr.bf16.mxu0 0
    %363 = vmatmul.mubr.bf16.gmra.mrb[0].mxu0 %v328
    %v364 = vpop.f32.mrb[0].mxu0
    %v365 = vadd.f32 0.0, %v364
    %v366 = vpop.f32.mrb[0].mxu0
    %v367 = vpop.f32.mrb[0].mxu0
    %v368 = vpop.f32.mrb[0].mxu0
    %369 = vdwg.mxu0
    %v370 = vadd.f32 %v322, %v365
    %v371 = vxor.u32 %v370, 2147483648
    %v372 = vmul.f32 %v371, 1.442695
    %v373 = vpow.pop %v372
    %v374 = vadd.f32 %v373, 1.0
    %v375 = vrcp.pop %v374
    %v376 = vmul.f32 1.0, %v375
    %v377 = vmul.f32 %v376, 2.0
    %v378 = vsub.f32 %v377, 1.0
    %v379 = vmul.f32 %v376, %v310
    %381 = vrot.lane.b32.xlu0 %v378, 64
    %v382 = vpop.permute.xlu0 %381
    %v384 = vmul.f32 %v376, %v382
    %386 = vrot.lane.b32.xlu0 %v384, 32
    %v387 = vpop.permute.xlu0 %386
    %v389 = vadd.f32 %v379, %v387
    %v390 = vtanh.pop %v389
    %392 = vrot.lane.b32.xlu0 %v390, 64
    %v393 = vpop.permute.xlu0 %392
    %v395 = vmul.f32 %v376, %v393
    %397 = vrot.lane.b32.xlu0 %v395, 32
    %v398 = vpop.permute.xlu0 %397
    %400 = vst.msk [vmem:[#allocation3 + $0x10] sm:$0xff] %vm225, %v398
    %v401 = vld [vmem:[#allocation2 + $0x18] sm:$0xff]
    %v402 = vpack.c.bf16 %v395, %v395
    %404 = vrot.lane.b32.xlu0 %v402, 32
    %v405 = vpop.permute.xlu0 %404
    %v407 = vsel %vm225, %v405, 0
    %409 = vmatprep.subr.bf16.mxu0 0
    %410 = vmatpush1.bf16.msra.mxu0 %v240
    %411 = vmatprep.subr.bf16.mxu0 0
    %412 = vmatpush1.bf16.msra.mxu0 %v241
    %413 = vmatprep.subr.bf16.mxu0 0
    %414 = vmatpush1.bf16.msra.mxu0 0
    %415 = vmatprep.subr.bf16.mxu0 0
    %416 = vmatpush1.bf16.msra.mxu0 0
    %417 = vmatprep.subr.bf16.mxu0 0
    %418 = vmatpush1.bf16.msra.mxu0 0
    %419 = vmatprep.subr.bf16.mxu0 0
    %420 = vmatpush1.bf16.msra.mxu0 0
    %421 = vmatprep.subr.bf16.mxu0 0
    %422 = vmatpush1.bf16.msra.mxu0 0
    %423 = vmatprep.subr.bf16.mxu0 0
    %424 = vmatpush1.bf16.msra.mxu0 0
    %425 = vmatprep.subr.bf16.mxu0 0
    %426 = vmatpush1.bf16.msra.mxu0 0
    %427 = vmatprep.subr.bf16.mxu0 0
    %428 = vmatpush1.bf16.msra.mxu0 0
    %429 = vmatprep.subr.bf16.mxu0 0
    %430 = vmatpush1.bf16.msra.mxu0 0
    %431 = vmatprep.subr.bf16.mxu0 0
    %432 = vmatpush1.bf16.msra.mxu0 0
    %433 = vmatprep.subr.bf16.mxu0 0
    %434 = vmatpush1.bf16.msra.mxu0 0
    %435 = vmatprep.subr.bf16.mxu0 0
    %436 = vmatpush1.bf16.msra.mxu0 0
    %437 = vmatprep.subr.bf16.mxu0 0
    %438 = vmatpush1.bf16.msra.mxu0 0
    %439 = vmatprep.subr.bf16.mxu0 0
    %440 = vmatpush1.bf16.msra.mxu0 0
    %441 = vmatprep.mubr.bf16.mxu0 0
    %442 = vmatmul.mubr.bf16.gmra.mrb[0].mxu0 %v407
    %v443 = vpop.f32.mrb[0].mxu0
    %v444 = vadd.f32 0.0, %v443
    %v445 = vpop.f32.mrb[0].mxu0
    %v446 = vpop.f32.mrb[0].mxu0
    %v447 = vpop.f32.mrb[0].mxu0
    %448 = vdwg.mxu0
    %v449 = vadd.f32 %v401, %v444
    %v450 = vxor.u32 %v449, 2147483648
    %v451 = vmul.f32 %v450, 1.442695
    %v452 = vpow.pop %v451
    %v453 = vadd.f32 %v452, 1.0
    %v454 = vrcp.pop %v453
    %v455 = vmul.f32 1.0, %v454
    %v456 = vmul.f32 %v455, 2.0
    %v457 = vsub.f32 %v456, 1.0
    %v458 = vmul.f32 %v455, %v389
    %460 = vrot.lane.b32.xlu0 %v457, 64
    %v461 = vpop.permute.xlu0 %460
    %v463 = vmul.f32 %v455, %v461
    %465 = vrot.lane.b32.xlu0 %v463, 32
    %v466 = vpop.permute.xlu0 %465
    %v468 = vadd.f32 %v458, %v466
    %v469 = vtanh.pop %v468
    %471 = vrot.lane.b32.xlu0 %v469, 64
    %v472 = vpop.permute.xlu0 %471
    %v474 = vmul.f32 %v455, %v472
    %476 = vrot.lane.b32.xlu0 %v474, 32
    %v477 = vpop.permute.xlu0 %476
    %479 = vst.msk [vmem:[#allocation3 + $0x18] sm:$0xff] %vm225, %v477
    %v480 = vld [vmem:[#allocation2 + $0x20] sm:$0xff]
    %v481 = vpack.c.bf16 %v474, %v474
    %483 = vrot.lane.b32.xlu0 %v481, 32
    %v484 = vpop.permute.xlu0 %483
    %v486 = vsel %vm225, %v484, 0
    %488 = vmatprep.subr.bf16.mxu0 0
    %489 = vmatpush1.bf16.msra.mxu0 %v240
    %490 = vmatprep.subr.bf16.mxu0 0
    %491 = vmatpush1.bf16.msra.mxu0 %v241
    %492 = vmatprep.subr.bf16.mxu0 0
    %493 = vmatpush1.bf16.msra.mxu0 0
    %494 = vmatprep.subr.bf16.mxu0 0
    %495 = vmatpush1.bf16.msra.mxu0 0
    %496 = vmatprep.subr.bf16.mxu0 0
    %497 = vmatpush1.bf16.msra.mxu0 0
    %498 = vmatprep.subr.bf16.mxu0 0
    %499 = vmatpush1.bf16.msra.mxu0 0
    %500 = vmatprep.subr.bf16.mxu0 0
    %501 = vmatpush1.bf16.msra.mxu0 0
    %502 = vmatprep.subr.bf16.mxu0 0
    %503 = vmatpush1.bf16.msra.mxu0 0
    %504 = vmatprep.subr.bf16.mxu0 0
    %505 = vmatpush1.bf16.msra.mxu0 0
    %506 = vmatprep.subr.bf16.mxu0 0
    %507 = vmatpush1.bf16.msra.mxu0 0
    %508 = vmatprep.subr.bf16.mxu0 0
    %509 = vmatpush1.bf16.msra.mxu0 0
    %510 = vmatprep.subr.bf16.mxu0 0
    %511 = vmatpush1.bf16.msra.mxu0 0
    %512 = vmatprep.subr.bf16.mxu0 0
    %513 = vmatpush1.bf16.msra.mxu0 0
    %514 = vmatprep.subr.bf16.mxu0 0
    %515 = vmatpush1.bf16.msra.mxu0 0
    %516 = vmatprep.subr.bf16.mxu0 0
    %517 = vmatpush1.bf16.msra.mxu0 0
    %518 = vmatprep.subr.bf16.mxu0 0
    %519 = vmatpush1.bf16.msra.mxu0 0
    %520 = vmatprep.mubr.bf16.mxu0 0
    %521 = vmatmul.mubr.bf16.gmra.mrb[0].mxu0 %v486
    %v522 = vpop.f32.mrb[0].mxu0
    %v523 = vadd.f32 0.0, %v522
    %v524 = vpop.f32.mrb[0].mxu0
    %v525 = vpop.f32.mrb[0].mxu0
    %v526 = vpop.f32.mrb[0].mxu0
    %527 = vdwg.mxu0
    %v528 = vadd.f32 %v480, %v523
    %v529 = vxor.u32 %v528, 2147483648
    %v530 = vmul.f32 %v529, 1.442695
    %v531 = vpow.pop %v530
    %v532 = vadd.f32 %v531, 1.0
    %v533 = vrcp.pop %v532
    %v534 = vmul.f32 1.0, %v533
    %v535 = vmul.f32 %v534, 2.0
    %v536 = vsub.f32 %v535, 1.0
    %v537 = vmul.f32 %v534, %v468
    %539 = vrot.lane.b32.xlu0 %v536, 64
    %v540 = vpop.permute.xlu0 %539
    %v542 = vmul.f32 %v534, %v540
    %544 = vrot.lane.b32.xlu0 %v542, 32
    %v545 = vpop.permute.xlu0 %544
    %v547 = vadd.f32 %v537, %v545
    %v548 = vtanh.pop %v547
    %550 = vrot.lane.b32.xlu0 %v548, 64
    %v551 = vpop.permute.xlu0 %550
    %v553 = vmul.f32 %v534, %v551
    %555 = vrot.lane.b32.xlu0 %v553, 32
    %v556 = vpop.permute.xlu0 %555
    %558 = vst.msk [vmem:[#allocation3 + $0x20] sm:$0xff] %vm225, %v556
    %v559 = vld [vmem:[#allocation2 + $0x28] sm:$0xff]
    %v560 = vpack.c.bf16 %v553, %v553
    %562 = vrot.lane.b32.xlu0 %v560, 32
    %v563 = vpop.permute.xlu0 %562
    %v565 = vsel %vm225, %v563, 0
    %567 = vmatprep.subr.bf16.mxu0 0
    %568 = vmatpush1.bf16.msra.mxu0 %v240
    %569 = vmatprep.subr.bf16.mxu0 0
    %570 = vmatpush1.bf16.msra.mxu0 %v241
    %571 = vmatprep.subr.bf16.mxu0 0
    %572 = vmatpush1.bf16.msra.mxu0 0
    %573 = vmatprep.subr.bf16.mxu0 0
    %574 = vmatpush1.bf16.msra.mxu0 0
    %575 = vmatprep.subr.bf16.mxu0 0
    %576 = vmatpush1.bf16.msra.mxu0 0
    %577 = vmatprep.subr.bf16.mxu0 0
    %578 = vmatpush1.bf16.msra.mxu0 0
    %579 = vmatprep.subr.bf16.mxu0 0
    %580 = vmatpush1.bf16.msra.mxu0 0
    %581 = vmatprep.subr.bf16.mxu0 0
    %582 = vmatpush1.bf16.msra.mxu0 0
    %583 = vmatprep.subr.bf16.mxu0 0
    %584 = vmatpush1.bf16.msra.mxu0 0
    %585 = vmatprep.subr.bf16.mxu0 0
    %586 = vmatpush1.bf16.msra.mxu0 0
    %587 = vmatprep.subr.bf16.mxu0 0
    %588 = vmatpush1.bf16.msra.mxu0 0
    %589 = vmatprep.subr.bf16.mxu0 0
    %590 = vmatpush1.bf16.msra.mxu0 0
    %591 = vmatprep.subr.bf16.mxu0 0
    %592 = vmatpush1.bf16.msra.mxu0 0
    %593 = vmatprep.subr.bf16.mxu0 0
    %594 = vmatpush1.bf16.msra.mxu0 0
    %595 = vmatprep.subr.bf16.mxu0 0
    %596 = vmatpush1.bf16.msra.mxu0 0
    %597 = vmatprep.subr.bf16.mxu0 0
    %598 = vmatpush1.bf16.msra.mxu0 0
    %599 = vmatprep.mubr.bf16.mxu0 0
    %600 = vmatmul.mubr.bf16.gmra.mrb[0].mxu0 %v565
    %v601 = vpop.f32.mrb[0].mxu0
    %v602 = vadd.f32 0.0, %v601
    %v603 = vpop.f32.mrb[0].mxu0
    %v604 = vpop.f32.mrb[0].mxu0
    %v605 = vpop.f32.mrb[0].mxu0
    %606 = vdwg.mxu0
    %v607 = vadd.f32 %v559, %v602
    %v608 = vxor.u32 %v607, 2147483648
    %v609 = vmul.f32 %v608, 1.442695
    %v610 = vpow.pop %v609
    %v611 = vadd.f32 %v610, 1.0
    %v612 = vrcp.pop %v611
    %v613 = vmul.f32 1.0, %v612
    %v614 = vmul.f32 %v613, 2.0
    %v615 = vsub.f32 %v614, 1.0
    %v616 = vmul.f32 %v613, %v547
    %618 = vrot.lane.b32.xlu0 %v615, 64
    %v619 = vpop.permute.xlu0 %618
    %v621 = vmul.f32 %v613, %v619
    %623 = vrot.lane.b32.xlu0 %v621, 32
    %v624 = vpop.permute.xlu0 %623
    %v626 = vadd.f32 %v616, %v624
    %v627 = vtanh.pop %v626
    %629 = vrot.lane.b32.xlu0 %v627, 64
    %v630 = vpop.permute.xlu0 %629
    %v632 = vmul.f32 %v613, %v630
    %634 = vrot.lane.b32.xlu0 %v632, 32
    %v635 = vpop.permute.xlu0 %634
    %637 = vst.msk [vmem:[#allocation3 + $0x28] sm:$0xff] %vm225, %v635
    %v638 = vld [vmem:[#allocation2 + $0x30] sm:$0xff]
    %v639 = vpack.c.bf16 %v632, %v632
    %641 = vrot.lane.b32.xlu0 %v639, 32
    %v642 = vpop.permute.xlu0 %641
    %v644 = vsel %vm225, %v642, 0
    %646 = vmatprep.subr.bf16.mxu0 0
    %647 = vmatpush1.bf16.msra.mxu0 %v240
    %648 = vmatprep.subr.bf16.mxu0 0
    %649 = vmatpush1.bf16.msra.mxu0 %v241
    %650 = vmatprep.subr.bf16.mxu0 0
    %651 = vmatpush1.bf16.msra.mxu0 0
    %652 = vmatprep.subr.bf16.mxu0 0
    %653 = vmatpush1.bf16.msra.mxu0 0
    %654 = vmatprep.subr.bf16.mxu0 0
    %655 = vmatpush1.bf16.msra.mxu0 0
    %656 = vmatprep.subr.bf16.mxu0 0
    %657 = vmatpush1.bf16.msra.mxu0 0
    %658 = vmatprep.subr.bf16.mxu0 0
    %659 = vmatpush1.bf16.msra.mxu0 0
    %660 = vmatprep.subr.bf16.mxu0 0
    %661 = vmatpush1.bf16.msra.mxu0 0
    %662 = vmatprep.subr.bf16.mxu0 0
    %663 = vmatpush1.bf16.msra.mxu0 0
    %664 = vmatprep.subr.bf16.mxu0 0
    %665 = vmatpush1.bf16.msra.mxu0 0
    %666 = vmatprep.subr.bf16.mxu0 0
    %667 = vmatpush1.bf16.msra.mxu0 0
    %668 = vmatprep.subr.bf16.mxu0 0
    %669 = vmatpush1.bf16.msra.mxu0 0
    %670 = vmatprep.subr.bf16.mxu0 0
    %671 = vmatpush1.bf16.msra.mxu0 0
    %672 = vmatprep.subr.bf16.mxu0 0
    %673 = vmatpush1.bf16.msra.mxu0 0
    %674 = vmatprep.subr.bf16.mxu0 0
    %675 = vmatpush1.bf16.msra.mxu0 0
    %676 = vmatprep.subr.bf16.mxu0 0
    %677 = vmatpush1.bf16.msra.mxu0 0
    %678 = vmatprep.mubr.bf16.mxu0 0
    %679 = vmatmul.mubr.bf16.gmra.mrb[0].mxu0 %v644
    %v680 = vpop.f32.mrb[0].mxu0
    %v681 = vadd.f32 0.0, %v680
    %v682 = vpop.f32.mrb[0].mxu0
    %v683 = vpop.f32.mrb[0].mxu0
    %v684 = vpop.f32.mrb[0].mxu0
    %685 = vdwg.mxu0
    %v686 = vadd.f32 %v638, %v681
    %v687 = vxor.u32 %v686, 2147483648
    %v688 = vmul.f32 %v687, 1.442695
    %v689 = vpow.pop %v688
    %v690 = vadd.f32 %v689, 1.0
    %v691 = vrcp.pop %v690
    %v692 = vmul.f32 1.0, %v691
    %v693 = vmul.f32 %v692, 2.0
    %v694 = vsub.f32 %v693, 1.0
    %v695 = vmul.f32 %v692, %v626
    %697 = vrot.lane.b32.xlu0 %v694, 64
    %v698 = vpop.permute.xlu0 %697
    %v700 = vmul.f32 %v692, %v698
    %702 = vrot.lane.b32.xlu0 %v700, 32
    %v703 = vpop.permute.xlu0 %702
    %v705 = vadd.f32 %v695, %v703
    %v706 = vtanh.pop %v705
    %708 = vrot.lane.b32.xlu0 %v706, 64
    %v709 = vpop.permute.xlu0 %708
    %v711 = vmul.f32 %v692, %v709
    %713 = vrot.lane.b32.xlu0 %v711, 32
    %v714 = vpop.permute.xlu0 %713
    %716 = vst.msk [vmem:[#allocation3 + $0x30] sm:$0xff] %vm225, %v714
    %v717 = vld [vmem:[#allocation2 + $0x38] sm:$0xff]
    %v718 = vpack.c.bf16 %v711, %v711
    %720 = vrot.lane.b32.xlu0 %v718, 32
    %v721 = vpop.permute.xlu0 %720
    %v723 = vsel %vm225, %v721, 0
    %725 = vmatprep.subr.bf16.mxu0 0
    %726 = vmatpush1.bf16.msra.mxu0 %v240
    %727 = vmatprep.subr.bf16.mxu0 0
    %728 = vmatpush1.bf16.msra.mxu0 %v241
    %729 = vmatprep.subr.bf16.mxu0 0
    %730 = vmatpush1.bf16.msra.mxu0 0
    %731 = vmatprep.subr.bf16.mxu0 0
    %732 = vmatpush1.bf16.msra.mxu0 0
    %733 = vmatprep.subr.bf16.mxu0 0
    %734 = vmatpush1.bf16.msra.mxu0 0
    %735 = vmatprep.subr.bf16.mxu0 0
    %736 = vmatpush1.bf16.msra.mxu0 0
    %737 = vmatprep.subr.bf16.mxu0 0
    %738 = vmatpush1.bf16.msra.mxu0 0
    %739 = vmatprep.subr.bf16.mxu0 0
    %740 = vmatpush1.bf16.msra.mxu0 0
    %741 = vmatprep.subr.bf16.mxu0 0
    %742 = vmatpush1.bf16.msra.mxu0 0
    %743 = vmatprep.subr.bf16.mxu0 0
    %744 = vmatpush1.bf16.msra.mxu0 0
    %745 = vmatprep.subr.bf16.mxu0 0
    %746 = vmatpush1.bf16.msra.mxu0 0
    %747 = vmatprep.subr.bf16.mxu0 0
    %748 = vmatpush1.bf16.msra.mxu0 0
    %749 = vmatprep.subr.bf16.mxu0 0
    %750 = vmatpush1.bf16.msra.mxu0 0
    %751 = vmatprep.subr.bf16.mxu0 0
    %752 = vmatpush1.bf16.msra.mxu0 0
    %753 = vmatprep.subr.bf16.mxu0 0
    %754 = vmatpush1.bf16.msra.mxu0 0
    %755 = vmatprep.subr.bf16.mxu0 0
    %756 = vmatpush1.bf16.msra.mxu0 0
    %757 = vmatprep.mubr.bf16.mxu0 0
    %758 = vmatmul.mubr.bf16.gmra.mrb[0].mxu0 %v723
    %v759 = vpop.f32.mrb[0].mxu0
    %v760 = vadd.f32 0.0, %v759
    %v761 = vpop.f32.mrb[0].mxu0
    %v762 = vpop.f32.mrb[0].mxu0
    %v763 = vpop.f32.mrb[0].mxu0
    %764 = vdwg.mxu0
    %v765 = vadd.f32 %v717, %v760
    %v766 = vxor.u32 %v765, 2147483648
    %v767 = vmul.f32 %v766, 1.442695
    %v768 = vpow.pop %v767
    %v769 = vadd.f32 %v768, 1.0
    %v770 = vrcp.pop %v769
    %v771 = vmul.f32 1.0, %v770
    %v772 = vmul.f32 %v771, 2.0
    %v773 = vsub.f32 %v772, 1.0
    %v774 = vmul.f32 %v771, %v705
    %776 = vrot.lane.b32.xlu0 %v773, 64
    %v777 = vpop.permute.xlu0 %776
    %v779 = vmul.f32 %v771, %v777
    %781 = vrot.lane.b32.xlu0 %v779, 32
    %v782 = vpop.permute.xlu0 %781
    %v784 = vadd.f32 %v774, %v782
    %v785 = vtanh.pop %v784
    %787 = vrot.lane.b32.xlu0 %v785, 64
    %v788 = vpop.permute.xlu0 %787
    %v790 = vmul.f32 %v771, %v788
    %792 = vrot.lane.b32.xlu0 %v790, 32
    %v793 = vpop.permute.xlu0 %792
    %795 = vst.msk [vmem:[#allocation3 + $0x38] sm:$0xff] %vm225, %v793
    %v796 = vld [vmem:[#allocation3] sm:$0xff]
    %v797 = vld [vmem:[#allocation3 + $0x8] sm:$0xff]
    %v798 = vld [vmem:[#allocation3 + $0x10] sm:$0xff]
    %v799 = vld [vmem:[#allocation3 + $0x18] sm:$0xff]
    %v800 = vld [vmem:[#allocation3 + $0x20] sm:$0xff]
    %v801 = vld [vmem:[#allocation3 + $0x28] sm:$0xff]
    %v802 = vld [vmem:[#allocation3 + $0x30] sm:$0xff]
    %v803 = vld [vmem:[#allocation3 + $0x38] sm:$0xff]
    %v804 = vpack.c.bf16 %v797, %v796
    %v805 = vpack.c.bf16 %v799, %v798
    %v806 = vpack.c.bf16 %v801, %v800
    %v807 = vpack.c.bf16 %v803, %v802
    %v808 = vld [vmem:[#allocation5] sm:$0xf]
    %v809 = vld [vmem:[#allocation5 + $0x4] sm:$0xf]
    %v810 = vld [vmem:[#allocation5 + $0x8] sm:$0xf]
    %v811 = vld [vmem:[#allocation5 + $0xc] sm:$0xf]
    %v812 = vld [vmem:[%s6] sm:$0x1]
    %v814 = vlaneseq
    %v815 = vshrl.u32 %v814, 7
    %v816 = vsub.s32 0, %v815
    %v817 = vrot.slane %v812, %v816
    %v823 = vunpack.c.l.b16 %v808
    %v824 = vunpack.c.l.b16 %v809
    %v825 = vunpack.c.l.b16 %v810
    %v826 = vunpack.c.l.b16 %v811
    %v827 = vpack.c.b16 %v824, %v823
    %v828 = vpack.c.b16 %v826, %v825
    %v832 = vsel %vm225, %v804, 0
    %v835 = vsel %vm225, %v805, 0
    %v838 = vsel %vm225, %v806, 0
    %v841 = vsel %vm225, %v807, 0
    %843 = vmatprep.subr.bf16.mxu0 0
    %844 = vmatpush1.bf16.msra.mxu0 %v827
    %845 = vmatprep.subr.bf16.mxu0 0
    %846 = vmatpush1.bf16.msra.mxu0 %v828
    %847 = vmatprep.subr.bf16.mxu0 0
    %848 = vmatpush1.bf16.msra.mxu0 0
    %849 = vmatprep.subr.bf16.mxu0 0
    %850 = vmatpush1.bf16.msra.mxu0 0
    %851 = vmatprep.subr.bf16.mxu0 0
    %852 = vmatpush1.bf16.msra.mxu0 0
    %853 = vmatprep.subr.bf16.mxu0 0
    %854 = vmatpush1.bf16.msra.mxu0 0
    %855 = vmatprep.subr.bf16.mxu0 0
    %856 = vmatpush1.bf16.msra.mxu0 0
    %857 = vmatprep.subr.bf16.mxu0 0
    %858 = vmatpush1.bf16.msra.mxu0 0
    %859 = vmatprep.subr.bf16.mxu0 0
    %860 = vmatpush1.bf16.msra.mxu0 0
    %861 = vmatprep.subr.bf16.mxu0 0
    %862 = vmatpush1.bf16.msra.mxu0 0
    %863 = vmatprep.subr.bf16.mxu0 0
    %864 = vmatpush1.bf16.msra.mxu0 0
    %865 = vmatprep.subr.bf16.mxu0 0
    %866 = vmatpush1.bf16.msra.mxu0 0
    %867 = vmatprep.subr.bf16.mxu0 0
    %868 = vmatpush1.bf16.msra.mxu0 0
    %869 = vmatprep.subr.bf16.mxu0 0
    %870 = vmatpush1.bf16.msra.mxu0 0
    %871 = vmatprep.subr.bf16.mxu0 0
    %872 = vmatpush1.bf16.msra.mxu0 0
    %873 = vmatprep.subr.bf16.mxu0 0
    %874 = vmatpush1.bf16.msra.mxu0 0
    %875 = vmatprep.mubr.bf16.mxu0 0
    %876 = vmatmul.mubr.bf16.gmra.mrb[0].mxu0 %v832
    %v877 = vpop.f32.mrb[0].mxu0
    %v878 = vadd.f32 %v817, %v877
    %v879 = vpop.f32.mrb[0].mxu0
    %v880 = vpop.f32.mrb[0].mxu0
    %v881 = vadd.f32 %v817, %v880
    %v882 = vpop.f32.mrb[0].mxu0
    %883 = vmatprep.mubr.bf16.mxu0 0
    %884 = vmatmul.mubr.bf16.gmra.mrb[0].mxu0 %v835
    %v885 = vpop.f32.mrb[0].mxu0
    %v886 = vadd.f32 %v817, %v885
    %v887 = vpop.f32.mrb[0].mxu0
    %v888 = vpop.f32.mrb[0].mxu0
    %v889 = vadd.f32 %v817, %v888
    %v890 = vpop.f32.mrb[0].mxu0
    %891 = vmatprep.mubr.bf16.mxu0 0
    %892 = vmatmul.mubr.bf16.gmra.mrb[0].mxu0 %v838
    %v893 = vpop.f32.mrb[0].mxu0
    %v894 = vadd.f32 %v817, %v893
    %v895 = vpop.f32.mrb[0].mxu0
    %v896 = vpop.f32.mrb[0].mxu0
    %v897 = vadd.f32 %v817, %v896
    %v898 = vpop.f32.mrb[0].mxu0
    %899 = vmatprep.mubr.bf16.mxu0 0
    %900 = vmatmul.mubr.bf16.gmra.mrb[0].mxu0 %v841
    %v901 = vpop.f32.mrb[0].mxu0
    %v902 = vadd.f32 %v817, %v901
    %v903 = vpop.f32.mrb[0].mxu0
    %v904 = vpop.f32.mrb[0].mxu0
    %v905 = vadd.f32 %v817, %v904
    %v906 = vpop.f32.mrb[0].mxu0
    %907 = vdwg.mxu0
    %908 = vst [vmem:[#allocation2] sm:$0xff] %v878
    %909 = vst [vmem:[#allocation2 + $0x8] sm:$0xff] %v881
    %910 = vst [vmem:[#allocation2 + $0x10] sm:$0xff] %v886
    %911 = vst [vmem:[#allocation2 + $0x18] sm:$0xff] %v889
    %912 = vst [vmem:[#allocation2 + $0x20] sm:$0xff] %v894
    %913 = vst [vmem:[#allocation2 + $0x28] sm:$0xff] %v897
    %914 = vst [vmem:[#allocation2 + $0x30] sm:$0xff] %v902
    %915 = vst [vmem:[#allocation2 + $0x38] sm:$0xff] %v905
    %v916 = vld [vmem:[#allocation8] sm:$0xf]
    %v917 = vld [vmem:[#allocation8 + $0x4] sm:$0xf]
    %v918 = vld [vmem:[#allocation8 + $0x8] sm:$0xf]
    %v919 = vld [vmem:[#allocation8 + $0xc] sm:$0xf]
    %v920 = vld [vmem:[#allocation2] sm:$0xff]
    %v921 = vxor.u32 %v920, 2147483648
    %v922 = vmul.f32 %v921, 1.442695
    %v923 = vpow.pop %v922
    %v924 = vadd.f32 %v923, 1.0
    %v925 = vrcp.pop %v924
    %v926 = vmul.f32 1.0, %v925
    %v927 = vmul.f32 %v926, 2.0
    %v928 = vsub.f32 %v927, 1.0
    %930 = vrot.lane.b32.xlu0 %v928, 64
    %v931 = vpop.permute.xlu0 %930
    %v933 = vmul.f32 %v926, %v931
    %v934 = vtanh.pop %v933
    %936 = vrot.lane.b32.xlu0 %v934, 96
    %v937 = vpop.permute.xlu0 %936
    %v939 = vmul.f32 %v926, %v937
    %941 = vrot.lane.b32.xlu0 %v939, 32
    %v942 = vpop.permute.xlu0 %941
    %vm944 = vcmask 261127
    %945 = vst.msk [vmem:[#allocation4 - $0x7] sm:$0x80] %vm944, %v942
    %v946 = vld [vmem:[#allocation2 + $0x8] sm:$0xff]
    %v947 = vpack.c.bf16 %v939, %v939
    %949 = vrot.lane.b32.xlu0 %v947, 32
    %v950 = vpop.permute.xlu0 %949
    %v955 = vunpack.c.l.b16 %v916
    %v956 = vunpack.c.l.b16 %v917
    %v957 = vunpack.c.l.b16 %v918
    %v958 = vunpack.c.l.b16 %v919
    %v959 = vpack.c.b16 %v956, %v955
    %v960 = vpack.c.b16 %v958, %v957
    %v964 = vsel %vm225, %v950, 0
    %966 = vmatprep.subr.bf16.mxu0 0
    %967 = vmatpush1.bf16.msra.mxu0 %v959
    %968 = vmatprep.subr.bf16.mxu0 0
    %969 = vmatpush1.bf16.msra.mxu0 %v960
    %970 = vmatprep.subr.bf16.mxu0 0
    %971 = vmatpush1.bf16.msra.mxu0 0
    %972 = vmatprep.subr.bf16.mxu0 0
    %973 = vmatpush1.bf16.msra.mxu0 0
    %974 = vmatprep.subr.bf16.mxu0 0
    %975 = vmatpush1.bf16.msra.mxu0 0
    %976 = vmatprep.subr.bf16.mxu0 0
    %977 = vmatpush1.bf16.msra.mxu0 0
    %978 = vmatprep.subr.bf16.mxu0 0
    %979 = vmatpush1.bf16.msra.mxu0 0
    %980 = vmatprep.subr.bf16.mxu0 0
    %981 = vmatpush1.bf16.msra.mxu0 0
    %982 = vmatprep.subr.bf16.mxu0 0
    %983 = vmatpush1.bf16.msra.mxu0 0
    %984 = vmatprep.subr.bf16.mxu0 0
    %985 = vmatpush1.bf16.msra.mxu0 0
    %986 = vmatprep.subr.bf16.mxu0 0
    %987 = vmatpush1.bf16.msra.mxu0 0
    %988 = vmatprep.subr.bf16.mxu0 0
    %989 = vmatpush1.bf16.msra.mxu0 0
    %990 = vmatprep.subr.bf16.mxu0 0
    %991 = vmatpush1.bf16.msra.mxu0 0
    %992 = vmatprep.subr.bf16.mxu0 0
    %993 = vmatpush1.bf16.msra.mxu0 0
    %994 = vmatprep.subr.bf16.mxu0 0
    %995 = vmatpush1.bf16.msra.mxu0 0
    %996 = vmatprep.subr.bf16.mxu0 0
    %997 = vmatpush1.bf16.msra.mxu0 0
    %998 = vmatprep.mubr.bf16.mxu0 0
    %999 = vmatmul.mubr.bf16.gmra.mrb[0].mxu0 %v964
    %v1000 = vpop.f32.mrb[0].mxu0
    %v1001 = vadd.f32 0.0, %v1000
    %v1002 = vpop.f32.mrb[0].mxu0
    %v1003 = vpop.f32.mrb[0].mxu0
    %v1004 = vpop.f32.mrb[0].mxu0
    %1005 = vdwg.mxu0
    %v1006 = vadd.f32 %v946, %v1001
    %v1007 = vxor.u32 %v1006, 2147483648
    %v1008 = vmul.f32 %v1007, 1.442695
    %v1009 = vpow.pop %v1008
    %v1010 = vadd.f32 %v1009, 1.0
    %v1011 = vrcp.pop %v1010
    %v1012 = vmul.f32 1.0, %v1011
    %v1013 = vmul.f32 %v1012, 2.0
    %v1014 = vsub.f32 %v1013, 1.0
    %1016 = vrot.lane.b32.xlu0 %v933, 32
    %v1017 = vpop.permute.xlu0 %1016
    %v1019 = vmul.f32 %v1012, %v1017
    %1021 = vrot.lane.b32.xlu0 %v1014, 64
    %v1022 = vpop.permute.xlu0 %1021
    %v1024 = vmul.f32 %v1012, %v1022
    %1026 = vrot.lane.b32.xlu0 %v1024, 32
    %v1027 = vpop.permute.xlu0 %1026
    %v1029 = vadd.f32 %v1019, %v1027
    %v1030 = vtanh.pop %v1029
    %1032 = vrot.lane.b32.xlu0 %v1030, 64
    %v1033 = vpop.permute.xlu0 %1032
    %v1035 = vmul.f32 %v1012, %v1033
    %1037 = vrot.lane.b32.xlu0 %v1035, 32
    %v1038 = vpop.permute.xlu0 %1037
    %1040 = vst.msk [vmem:[#allocation4 - $0x6] sm:$0x80] %vm944, %v1038
    %v1041 = vld [vmem:[#allocation2 + $0x10] sm:$0xff]
    %v1042 = vpack.c.bf16 %v1035, %v1035
    %1044 = vrot.lane.b32.xlu0 %v1042, 32
    %v1045 = vpop.permute.xlu0 %1044
    %v1047 = vsel %vm225, %v1045, 0
    %1049 = vmatprep.subr.bf16.mxu0 0
    %1050 = vmatpush1.bf16.msra.mxu0 %v959
    %1051 = vmatprep.subr.bf16.mxu0 0
    %1052 = vmatpush1.bf16.msra.mxu0 %v960
    %1053 = vmatprep.subr.bf16.mxu0 0
    %1054 = vmatpush1.bf16.msra.mxu0 0
    %1055 = vmatprep.subr.bf16.mxu0 0
    %1056 = vmatpush1.bf16.msra.mxu0 0
    %1057 = vmatprep.subr.bf16.mxu0 0
    %1058 = vmatpush1.bf16.msra.mxu0 0
    %1059 = vmatprep.subr.bf16.mxu0 0
    %1060 = vmatpush1.bf16.msra.mxu0 0
    %1061 = vmatprep.subr.bf16.mxu0 0
    %1062 = vmatpush1.bf16.msra.mxu0 0
    %1063 = vmatprep.subr.bf16.mxu0 0
    %1064 = vmatpush1.bf16.msra.mxu0 0
    %1065 = vmatprep.subr.bf16.mxu0 0
    %1066 = vmatpush1.bf16.msra.mxu0 0
    %1067 = vmatprep.subr.bf16.mxu0 0
    %1068 = vmatpush1.bf16.msra.mxu0 0
    %1069 = vmatprep.subr.bf16.mxu0 0
    %1070 = vmatpush1.bf16.msra.mxu0 0
    %1071 = vmatprep.subr.bf16.mxu0 0
    %1072 = vmatpush1.bf16.msra.mxu0 0
    %1073 = vmatprep.subr.bf16.mxu0 0
    %1074 = vmatpush1.bf16.msra.mxu0 0
    %1075 = vmatprep.subr.bf16.mxu0 0
    %1076 = vmatpush1.bf16.msra.mxu0 0
    %1077 = vmatprep.subr.bf16.mxu0 0
    %1078 = vmatpush1.bf16.msra.mxu0 0
    %1079 = vmatprep.subr.bf16.mxu0 0
    %1080 = vmatpush1.bf16.msra.mxu0 0
    %1081 = vmatprep.mubr.bf16.mxu0 0
    %1082 = vmatmul.mubr.bf16.gmra.mrb[0].mxu0 %v1047
    %v1083 = vpop.f32.mrb[0].mxu0
    %v1084 = vadd.f32 0.0, %v1083
    %v1085 = vpop.f32.mrb[0].mxu0
    %v1086 = vpop.f32.mrb[0].mxu0
    %v1087 = vpop.f32.mrb[0].mxu0
    %1088 = vdwg.mxu0
    %v1089 = vadd.f32 %v1041, %v1084
    %v1090 = vxor.u32 %v1089, 2147483648
    %v1091 = vmul.f32 %v1090, 1.442695
    %v1092 = vpow.pop %v1091
    %v1093 = vadd.f32 %v1092, 1.0
    %v1094 = vrcp.pop %v1093
    %v1095 = vmul.f32 1.0, %v1094
    %v1096 = vmul.f32 %v1095, 2.0
    %v1097 = vsub.f32 %v1096, 1.0
    %v1098 = vmul.f32 %v1095, %v1029
    %1100 = vrot.lane.b32.xlu0 %v1097, 64
    %v1101 = vpop.permute.xlu0 %1100
    %v1103 = vmul.f32 %v1095, %v1101
    %1105 = vrot.lane.b32.xlu0 %v1103, 32
    %v1106 = vpop.permute.xlu0 %1105
    %v1108 = vadd.f32 %v1098, %v1106
    %v1109 = vtanh.pop %v1108
    %1111 = vrot.lane.b32.xlu0 %v1109, 64
    %v1112 = vpop.permute.xlu0 %1111
    %v1114 = vmul.f32 %v1095, %v1112
    %1116 = vrot.lane.b32.xlu0 %v1114, 32
    %v1117 = vpop.permute.xlu0 %1116
    %1119 = vst.msk [vmem:[#allocation4 - $0x5] sm:$0x80] %vm944, %v1117
    %v1120 = vld [vmem:[#allocation2 + $0x18] sm:$0xff]
    %v1121 = vpack.c.bf16 %v1114, %v1114
    %1123 = vrot.lane.b32.xlu0 %v1121, 32
    %v1124 = vpop.permute.xlu0 %1123
    %v1126 = vsel %vm225, %v1124, 0
    %1128 = vmatprep.subr.bf16.mxu0 0
    %1129 = vmatpush1.bf16.msra.mxu0 %v959
    %1130 = vmatprep.subr.bf16.mxu0 0
    %1131 = vmatpush1.bf16.msra.mxu0 %v960
    %1132 = vmatprep.subr.bf16.mxu0 0
    %1133 = vmatpush1.bf16.msra.mxu0 0
    %1134 = vmatprep.subr.bf16.mxu0 0
    %1135 = vmatpush1.bf16.msra.mxu0 0
    %1136 = vmatprep.subr.bf16.mxu0 0
    %1137 = vmatpush1.bf16.msra.mxu0 0
    %1138 = vmatprep.subr.bf16.mxu0 0
    %1139 = vmatpush1.bf16.msra.mxu0 0
    %1140 = vmatprep.subr.bf16.mxu0 0
    %1141 = vmatpush1.bf16.msra.mxu0 0
    %1142 = vmatprep.subr.bf16.mxu0 0
    %1143 = vmatpush1.bf16.msra.mxu0 0
    %1144 = vmatprep.subr.bf16.mxu0 0
    %1145 = vmatpush1.bf16.msra.mxu0 0
    %1146 = vmatprep.subr.bf16.mxu0 0
    %1147 = vmatpush1.bf16.msra.mxu0 0
    %1148 = vmatprep.subr.bf16.mxu0 0
    %1149 = vmatpush1.bf16.msra.mxu0 0
    %1150 = vmatprep.subr.bf16.mxu0 0
    %1151 = vmatpush1.bf16.msra.mxu0 0
    %1152 = vmatprep.subr.bf16.mxu0 0
    %1153 = vmatpush1.bf16.msra.mxu0 0
    %1154 = vmatprep.subr.bf16.mxu0 0
    %1155 = vmatpush1.bf16.msra.mxu0 0
    %1156 = vmatprep.subr.bf16.mxu0 0
    %1157 = vmatpush1.bf16.msra.mxu0 0
    %1158 = vmatprep.subr.bf16.mxu0 0
    %1159 = vmatpush1.bf16.msra.mxu0 0
    %1160 = vmatprep.mubr.bf16.mxu0 0
    %1161 = vmatmul.mubr.bf16.gmra.mrb[0].mxu0 %v1126
    %v1162 = vpop.f32.mrb[0].mxu0
    %v1163 = vadd.f32 0.0, %v1162
    %v1164 = vpop.f32.mrb[0].mxu0
    %v1165 = vpop.f32.mrb[0].mxu0
    %v1166 = vpop.f32.mrb[0].mxu0
    %1167 = vdwg.mxu0
    %v1168 = vadd.f32 %v1120, %v1163
    %v1169 = vxor.u32 %v1168, 2147483648
    %v1170 = vmul.f32 %v1169, 1.442695
    %v1171 = vpow.pop %v1170
    %v1172 = vadd.f32 %v1171, 1.0
    %v1173 = vrcp.pop %v1172
    %v1174 = vmul.f32 1.0, %v1173
    %v1175 = vmul.f32 %v1174, 2.0
    %v1176 = vsub.f32 %v1175, 1.0
    %v1177 = vmul.f32 %v1174, %v1108
    %1179 = vrot.lane.b32.xlu0 %v1176, 64
    %v1180 = vpop.permute.xlu0 %1179
    %v1182 = vmul.f32 %v1174, %v1180
    %1184 = vrot.lane.b32.xlu0 %v1182, 32
    %v1185 = vpop.permute.xlu0 %1184
    %v1187 = vadd.f32 %v1177, %v1185
    %v1188 = vtanh.pop %v1187
    %1190 = vrot.lane.b32.xlu0 %v1188, 64
    %v1191 = vpop.permute.xlu0 %1190
    %v1193 = vmul.f32 %v1174, %v1191
    %1195 = vrot.lane.b32.xlu0 %v1193, 32
    %v1196 = vpop.permute.xlu0 %1195
    %1198 = vst.msk [vmem:[#allocation4 - $0x4] sm:$0x80] %vm944, %v1196
    %v1199 = vld [vmem:[#allocation2 + $0x20] sm:$0xff]
    %v1200 = vpack.c.bf16 %v1193, %v1193
    %1202 = vrot.lane.b32.xlu0 %v1200, 32
    %v1203 = vpop.permute.xlu0 %1202
    %v1205 = vsel %vm225, %v1203, 0
    %1207 = vmatprep.subr.bf16.mxu0 0
    %1208 = vmatpush1.bf16.msra.mxu0 %v959
    %1209 = vmatprep.subr.bf16.mxu0 0
    %1210 = vmatpush1.bf16.msra.mxu0 %v960
    %1211 = vmatprep.subr.bf16.mxu0 0
    %1212 = vmatpush1.bf16.msra.mxu0 0
    %1213 = vmatprep.subr.bf16.mxu0 0
    %1214 = vmatpush1.bf16.msra.mxu0 0
    %1215 = vmatprep.subr.bf16.mxu0 0
    %1216 = vmatpush1.bf16.msra.mxu0 0
    %1217 = vmatprep.subr.bf16.mxu0 0
    %1218 = vmatpush1.bf16.msra.mxu0 0
    %1219 = vmatprep.subr.bf16.mxu0 0
    %1220 = vmatpush1.bf16.msra.mxu0 0
    %1221 = vmatprep.subr.bf16.mxu0 0
    %1222 = vmatpush1.bf16.msra.mxu0 0
    %1223 = vmatprep.subr.bf16.mxu0 0
    %1224 = vmatpush1.bf16.msra.mxu0 0
    %1225 = vmatprep.subr.bf16.mxu0 0
    %1226 = vmatpush1.bf16.msra.mxu0 0
    %1227 = vmatprep.subr.bf16.mxu0 0
    %1228 = vmatpush1.bf16.msra.mxu0 0
    %1229 = vmatprep.subr.bf16.mxu0 0
    %1230 = vmatpush1.bf16.msra.mxu0 0
    %1231 = vmatprep.subr.bf16.mxu0 0
    %1232 = vmatpush1.bf16.msra.mxu0 0
    %1233 = vmatprep.subr.bf16.mxu0 0
    %1234 = vmatpush1.bf16.msra.mxu0 0
    %1235 = vmatprep.subr.bf16.mxu0 0
    %1236 = vmatpush1.bf16.msra.mxu0 0
    %1237 = vmatprep.subr.bf16.mxu0 0
    %1238 = vmatpush1.bf16.msra.mxu0 0
    %1239 = vmatprep.mubr.bf16.mxu0 0
    %1240 = vmatmul.mubr.bf16.gmra.mrb[0].mxu0 %v1205
    %v1241 = vpop.f32.mrb[0].mxu0
    %v1242 = vadd.f32 0.0, %v1241
    %v1243 = vpop.f32.mrb[0].mxu0
    %v1244 = vpop.f32.mrb[0].mxu0
    %v1245 = vpop.f32.mrb[0].mxu0
    %1246 = vdwg.mxu0
    %v1247 = vadd.f32 %v1199, %v1242
    %v1248 = vxor.u32 %v1247, 2147483648
    %v1249 = vmul.f32 %v1248, 1.442695
    %v1250 = vpow.pop %v1249
    %v1251 = vadd.f32 %v1250, 1.0
    %v1252 = vrcp.pop %v1251
    %v1253 = vmul.f32 1.0, %v1252
    %v1254 = vmul.f32 %v1253, 2.0
    %v1255 = vsub.f32 %v1254, 1.0
    %v1256 = vmul.f32 %v1253, %v1187
    %1258 = vrot.lane.b32.xlu0 %v1255, 64
    %v1259 = vpop.permute.xlu0 %1258
    %v1261 = vmul.f32 %v1253, %v1259
    %1263 = vrot.lane.b32.xlu0 %v1261, 32
    %v1264 = vpop.permute.xlu0 %1263
    %v1266 = vadd.f32 %v1256, %v1264
    %v1267 = vtanh.pop %v1266
    %1269 = vrot.lane.b32.xlu0 %v1267, 64
    %v1270 = vpop.permute.xlu0 %1269
    %v1272 = vmul.f32 %v1253, %v1270
    %1274 = vrot.lane.b32.xlu0 %v1272, 32
    %v1275 = vpop.permute.xlu0 %1274
    %1277 = vst.msk [vmem:[#allocation4 - $0x3] sm:$0x80] %vm944, %v1275
    %v1278 = vld [vmem:[#allocation2 + $0x28] sm:$0xff]
    %v1279 = vpack.c.bf16 %v1272, %v1272
    %1281 = vrot.lane.b32.xlu0 %v1279, 32
    %v1282 = vpop.permute.xlu0 %1281
    %v1284 = vsel %vm225, %v1282, 0
    %1286 = vmatprep.subr.bf16.mxu0 0
    %1287 = vmatpush1.bf16.msra.mxu0 %v959
    %1288 = vmatprep.subr.bf16.mxu0 0
    %1289 = vmatpush1.bf16.msra.mxu0 %v960
    %1290 = vmatprep.subr.bf16.mxu0 0
    %1291 = vmatpush1.bf16.msra.mxu0 0
    %1292 = vmatprep.subr.bf16.mxu0 0
    %1293 = vmatpush1.bf16.msra.mxu0 0
    %1294 = vmatprep.subr.bf16.mxu0 0
    %1295 = vmatpush1.bf16.msra.mxu0 0
    %1296 = vmatprep.subr.bf16.mxu0 0
    %1297 = vmatpush1.bf16.msra.mxu0 0
    %1298 = vmatprep.subr.bf16.mxu0 0
    %1299 = vmatpush1.bf16.msra.mxu0 0
    %1300 = vmatprep.subr.bf16.mxu0 0
    %1301 = vmatpush1.bf16.msra.mxu0 0
    %1302 = vmatprep.subr.bf16.mxu0 0
    %1303 = vmatpush1.bf16.msra.mxu0 0
    %1304 = vmatprep.subr.bf16.mxu0 0
    %1305 = vmatpush1.bf16.msra.mxu0 0
    %1306 = vmatprep.subr.bf16.mxu0 0
    %1307 = vmatpush1.bf16.msra.mxu0 0
    %1308 = vmatprep.subr.bf16.mxu0 0
    %1309 = vmatpush1.bf16.msra.mxu0 0
    %1310 = vmatprep.subr.bf16.mxu0 0
    %1311 = vmatpush1.bf16.msra.mxu0 0
    %1312 = vmatprep.subr.bf16.mxu0 0
    %1313 = vmatpush1.bf16.msra.mxu0 0
    %1314 = vmatprep.subr.bf16.mxu0 0
    %1315 = vmatpush1.bf16.msra.mxu0 0
    %1316 = vmatprep.subr.bf16.mxu0 0
    %1317 = vmatpush1.bf16.msra.mxu0 0
    %1318 = vmatprep.mubr.bf16.mxu0 0
    %1319 = vmatmul.mubr.bf16.gmra.mrb[0].mxu0 %v1284
    %v1320 = vpop.f32.mrb[0].mxu0
    %v1321 = vadd.f32 0.0, %v1320
    %v1322 = vpop.f32.mrb[0].mxu0
    %v1323 = vpop.f32.mrb[0].mxu0
    %v1324 = vpop.f32.mrb[0].mxu0
    %1325 = vdwg.mxu0
    %v1326 = vadd.f32 %v1278, %v1321
    %v1327 = vxor.u32 %v1326, 2147483648
    %v1328 = vmul.f32 %v1327, 1.442695
    %v1329 = vpow.pop %v1328
    %v1330 = vadd.f32 %v1329, 1.0
    %v1331 = vrcp.pop %v1330
    %v1332 = vmul.f32 1.0, %v1331
    %v1333 = vmul.f32 %v1332, 2.0
    %v1334 = vsub.f32 %v1333, 1.0
    %v1335 = vmul.f32 %v1332, %v1266
    %1337 = vrot.lane.b32.xlu0 %v1334, 64
    %v1338 = vpop.permute.xlu0 %1337
    %v1340 = vmul.f32 %v1332, %v1338
    %1342 = vrot.lane.b32.xlu0 %v1340, 32
    %v1343 = vpop.permute.xlu0 %1342
    %v1345 = vadd.f32 %v1335, %v1343
    %v1346 = vtanh.pop %v1345
    %1348 = vrot.lane.b32.xlu0 %v1346, 64
    %v1349 = vpop.permute.xlu0 %1348
    %v1351 = vmul.f32 %v1332, %v1349
    %1353 = vrot.lane.b32.xlu0 %v1351, 32
    %v1354 = vpop.permute.xlu0 %1353
    %1356 = vst.msk [vmem:[#allocation4 - $0x2] sm:$0x80] %vm944, %v1354
    %v1357 = vld [vmem:[#allocation2 + $0x30] sm:$0xff]
    %v1358 = vpack.c.bf16 %v1351, %v1351
    %1360 = vrot.lane.b32.xlu0 %v1358, 32
    %v1361 = vpop.permute.xlu0 %1360
    %v1363 = vsel %vm225, %v1361, 0
    %1365 = vmatprep.subr.bf16.mxu0 0
    %1366 = vmatpush1.bf16.msra.mxu0 %v959
    %1367 = vmatprep.subr.bf16.mxu0 0
    %1368 = vmatpush1.bf16.msra.mxu0 %v960
    %1369 = vmatprep.subr.bf16.mxu0 0
    %1370 = vmatpush1.bf16.msra.mxu0 0
    %1371 = vmatprep.subr.bf16.mxu0 0
    %1372 = vmatpush1.bf16.msra.mxu0 0
    %1373 = vmatprep.subr.bf16.mxu0 0
    %1374 = vmatpush1.bf16.msra.mxu0 0
    %1375 = vmatprep.subr.bf16.mxu0 0
    %1376 = vmatpush1.bf16.msra.mxu0 0
    %1377 = vmatprep.subr.bf16.mxu0 0
    %1378 = vmatpush1.bf16.msra.mxu0 0
    %1379 = vmatprep.subr.bf16.mxu0 0
    %1380 = vmatpush1.bf16.msra.mxu0 0
    %1381 = vmatprep.subr.bf16.mxu0 0
    %1382 = vmatpush1.bf16.msra.mxu0 0
    %1383 = vmatprep.subr.bf16.mxu0 0
    %1384 = vmatpush1.bf16.msra.mxu0 0
    %1385 = vmatprep.subr.bf16.mxu0 0
    %1386 = vmatpush1.bf16.msra.mxu0 0
    %1387 = vmatprep.subr.bf16.mxu0 0
    %1388 = vmatpush1.bf16.msra.mxu0 0
    %1389 = vmatprep.subr.bf16.mxu0 0
    %1390 = vmatpush1.bf16.msra.mxu0 0
    %1391 = vmatprep.subr.bf16.mxu0 0
    %1392 = vmatpush1.bf16.msra.mxu0 0
    %1393 = vmatprep.subr.bf16.mxu0 0
    %1394 = vmatpush1.bf16.msra.mxu0 0
    %1395 = vmatprep.subr.bf16.mxu0 0
    %1396 = vmatpush1.bf16.msra.mxu0 0
    %1397 = vmatprep.mubr.bf16.mxu0 0
    %1398 = vmatmul.mubr.bf16.gmra.mrb[0].mxu0 %v1363
    %v1399 = vpop.f32.mrb[0].mxu0
    %v1400 = vadd.f32 0.0, %v1399
    %v1401 = vpop.f32.mrb[0].mxu0
    %v1402 = vpop.f32.mrb[0].mxu0
    %v1403 = vpop.f32.mrb[0].mxu0
    %1404 = vdwg.mxu0
    %v1405 = vadd.f32 %v1357, %v1400
    %v1406 = vxor.u32 %v1405, 2147483648
    %v1407 = vmul.f32 %v1406, 1.442695
    %v1408 = vpow.pop %v1407
    %v1409 = vadd.f32 %v1408, 1.0
    %v1410 = vrcp.pop %v1409
    %v1411 = vmul.f32 1.0, %v1410
    %v1412 = vmul.f32 %v1411, 2.0
    %v1413 = vsub.f32 %v1412, 1.0
    %v1414 = vmul.f32 %v1411, %v1345
    %1416 = vrot.lane.b32.xlu0 %v1413, 64
    %v1417 = vpop.permute.xlu0 %1416
    %v1419 = vmul.f32 %v1411, %v1417
    %1421 = vrot.lane.b32.xlu0 %v1419, 32
    %v1422 = vpop.permute.xlu0 %1421
    %v1424 = vadd.f32 %v1414, %v1422
    %v1425 = vtanh.pop %v1424
    %1427 = vrot.lane.b32.xlu0 %v1425, 64
    %v1428 = vpop.permute.xlu0 %1427
    %v1430 = vmul.f32 %v1411, %v1428
    %1432 = vrot.lane.b32.xlu0 %v1430, 32
    %v1433 = vpop.permute.xlu0 %1432
    %1435 = vst.msk [vmem:[#allocation4 - $0x1] sm:$0x80] %vm944, %v1433
    %v1436 = vld [vmem:[#allocation2 + $0x38] sm:$0xff]
    %v1437 = vpack.c.bf16 %v1430, %v1430
    %1439 = vrot.lane.b32.xlu0 %v1437, 32
    %v1440 = vpop.permute.xlu0 %1439
    %v1442 = vsel %vm225, %v1440, 0
    %1444 = vmatprep.subr.bf16.mxu0 0
    %1445 = vmatpush1.bf16.msra.mxu0 %v959
    %1446 = vmatprep.subr.bf16.mxu0 0
    %1447 = vmatpush1.bf16.msra.mxu0 %v960
    %1448 = vmatprep.subr.bf16.mxu0 0
    %1449 = vmatpush1.bf16.msra.mxu0 0
    %1450 = vmatprep.subr.bf16.mxu0 0
    %1451 = vmatpush1.bf16.msra.mxu0 0
    %1452 = vmatprep.subr.bf16.mxu0 0
    %1453 = vmatpush1.bf16.msra.mxu0 0
    %1454 = vmatprep.subr.bf16.mxu0 0
    %1455 = vmatpush1.bf16.msra.mxu0 0
    %1456 = vmatprep.subr.bf16.mxu0 0
    %1457 = vmatpush1.bf16.msra.mxu0 0
    %1458 = vmatprep.subr.bf16.mxu0 0
    %1459 = vmatpush1.bf16.msra.mxu0 0
    %1460 = vmatprep.subr.bf16.mxu0 0
    %1461 = vmatpush1.bf16.msra.mxu0 0
    %1462 = vmatprep.subr.bf16.mxu0 0
    %1463 = vmatpush1.bf16.msra.mxu0 0
    %1464 = vmatprep.subr.bf16.mxu0 0
    %1465 = vmatpush1.bf16.msra.mxu0 0
    %1466 = vmatprep.subr.bf16.mxu0 0
    %1467 = vmatpush1.bf16.msra.mxu0 0
    %1468 = vmatprep.subr.bf16.mxu0 0
    %1469 = vmatpush1.bf16.msra.mxu0 0
    %1470 = vmatprep.subr.bf16.mxu0 0
    %1471 = vmatpush1.bf16.msra.mxu0 0
    %1472 = vmatprep.subr.bf16.mxu0 0
    %1473 = vmatpush1.bf16.msra.mxu0 0
    %1474 = vmatprep.subr.bf16.mxu0 0
    %1475 = vmatpush1.bf16.msra.mxu0 0
    %1476 = vmatprep.mubr.bf16.mxu0 0
    %1477 = vmatmul.mubr.bf16.gmra.mrb[0].mxu0 %v1442
    %v1478 = vpop.f32.mrb[0].mxu0
    %v1479 = vadd.f32 0.0, %v1478
    %v1480 = vpop.f32.mrb[0].mxu0
    %v1481 = vpop.f32.mrb[0].mxu0
    %v1482 = vpop.f32.mrb[0].mxu0
    %1483 = vdwg.mxu0
    %v1484 = vadd.f32 %v1436, %v1479
    %v1485 = vxor.u32 %v1484, 2147483648
    %v1486 = vmul.f32 %v1485, 1.442695
    %v1487 = vpow.pop %v1486
    %v1488 = vadd.f32 %v1487, 1.0
    %v1489 = vrcp.pop %v1488
    %v1490 = vmul.f32 1.0, %v1489
    %v1491 = vmul.f32 %v1490, 2.0
    %v1492 = vsub.f32 %v1491, 1.0
    %v1493 = vmul.f32 %v1490, %v1424
    %1495 = vrot.lane.b32.xlu0 %v1492, 64
    %v1496 = vpop.permute.xlu0 %1495
    %v1498 = vmul.f32 %v1490, %v1496
    %1500 = vrot.lane.b32.xlu0 %v1498, 32
    %v1501 = vpop.permute.xlu0 %1500
    %v1503 = vadd.f32 %v1493, %v1501
    %v1504 = vtanh.pop %v1503
    %1506 = vrot.lane.b32.xlu0 %v1504, 64
    %v1507 = vpop.permute.xlu0 %1506
    %v1509 = vmul.f32 %v1490, %v1507
    %1511 = vrot.lane.b32.xlu0 %v1509, 32
    %v1512 = vpop.permute.xlu0 %1511
    %1514 = vst.msk [vmem:[#allocation4] sm:$0x80] %vm944, %v1512
    %v1515 = vld [vmem:[#allocation4] sm:$0xff]
    %v1516 = vsel %vm225, %v1515, 0.0
    %v1517 = vrot.slane %v1516, 4
    %v1518 = vadd.f32 %v1516, %v1517
    %v1519 = vrot.slane %v1518, 2
    %v1520 = vadd.f32 %v1518, %v1519
    %v1521 = vrot.slane %v1520, 1
    %v1522 = vadd.f32 %v1520, %v1521
    %v1523 = vrcp.pop 8.0
    %v1524 = vmul.f32 %v1522, %v1523
    %v1525 = vsub.f32 %v1515, %v1524
    %v1526 = vmul.f32 %v1525, %v1525
    %v1527 = vsel %vm225, %v1526, 0.0
    %v1528 = vrot.slane %v1527, 4
    %v1529 = vadd.f32 %v1527, %v1528
    %v1530 = vrot.slane %v1529, 2
    %v1531 = vadd.f32 %v1529, %v1530
    %v1532 = vrot.slane %v1531, 1
    %v1533 = vadd.f32 %v1531, %v1532
    %v1534 = vmul.f32 %v1533, %v1523
    %v1535 = vadd.f32 %v1534, 1e-05
    %v1536 = vrsqrt.pop %v1535
    %v1537 = vmul.f32 %v1525, %v1536
    %v1538 = vld [vmem:[%s7] sm:$0x1]
    %v1540 = vlaneseq
    %v1541 = vshrl.u32 %v1540, 7
    %v1542 = vsub.s32 0, %v1541
    %v1543 = vrot.slane %v1538, %v1542
    %v1545 = vmul.f32 %v1537, %v1543
    %v1546 = vld [vmem:[%s8] sm:$0x1]
    %v1548 = vlaneseq
    %v1549 = vshrl.u32 %v1548, 7
    %v1550 = vsub.s32 0, %v1549
    %v1551 = vrot.slane %v1546, %v1550
    %v1553 = vadd.f32 %v1545, %v1551
    %v1554 = vld [vmem:[%s9] sm:$0xff]
    %v1555 = vld [vmem:[%s9 + $0x8] sm:$0xff]
    %v1556 = vld [vmem:[%s9 + $0x10] sm:$0xff]
    %v1557 = vld [vmem:[%s9 + $0x18] sm:$0xff]
    %v1558 = vld [vmem:[%s10] sm:$0x1]
    %v1560 = vlaneseq
    %v1561 = vshrl.u32 %v1560, 7
    %v1562 = vsub.s32 0, %v1561
    %v1563 = vrot.slane %v1558, %v1562
    %v1566 = vsel %vm225, %v1553, 0
    %1568 = vmatprep.subr.mxu0 0.0
    %1569 = vmatpush1.msra.mxu0 %v1554
    %1570 = vmatprep.subr.mxu0 0.0
    %1571 = vmatpush1.msra.mxu0 %v1555
    %1572 = vmatprep.subr.mxu0 0.0
    %1573 = vmatpush1.msra.mxu0 %v1556
    %1574 = vmatprep.subr.mxu0 0.0
    %1575 = vmatpush1.msra.mxu0 %v1557
    %1576 = vmatprep.subr.mxu0 0.0
    %1577 = vmatpush1.msra.mxu0 0.0
    %1578 = vmatprep.subr.mxu0 0.0
    %1579 = vmatpush1.msra.mxu0 0.0
    %1580 = vmatprep.subr.mxu0 0.0
    %1581 = vmatpush1.msra.mxu0 0.0
    %1582 = vmatprep.subr.mxu0 0.0
    %1583 = vmatpush1.msra.mxu0 0.0
    %1584 = vmatprep.subr.mxu0 0.0
    %1585 = vmatpush1.msra.mxu0 0.0
    %1586 = vmatprep.subr.mxu0 0.0
    %1587 = vmatpush1.msra.mxu0 0.0
    %1588 = vmatprep.subr.mxu0 0.0
    %1589 = vmatpush1.msra.mxu0 0.0
    %1590 = vmatprep.subr.mxu0 0.0
    %1591 = vmatpush1.msra.mxu0 0.0
    %1592 = vmatprep.subr.mxu0 0.0
    %1593 = vmatpush1.msra.mxu0 0.0
    %1594 = vmatprep.subr.mxu0 0.0
    %1595 = vmatpush1.msra.mxu0 0.0
    %1596 = vmatprep.subr.mxu0 0.0
    %1597 = vmatpush1.msra.mxu0 0.0
    %1598 = vmatprep.subr.mxu0 0.0
    %1599 = vmatpush1.msra.mxu0 0.0
    %1600 = vmatprep.subr.mxu0 0.0
    %1601 = vmatpush1.msra.mxu0 0.0
    %1602 = vmatprep.subr.mxu0 0.0
    %1603 = vmatpush1.msra.mxu0 0.0
    %1604 = vmatprep.subr.mxu0 0.0
    %1605 = vmatpush1.msra.mxu0 0.0
    %1606 = vmatprep.subr.mxu0 0.0
    %1607 = vmatpush1.msra.mxu0 0.0
    %1608 = vmatprep.subr.mxu0 0.0
    %1609 = vmatpush1.msra.mxu0 0.0
    %1610 = vmatprep.subr.mxu0 0.0
    %1611 = vmatpush1.msra.mxu0 0.0
    %1612 = vmatprep.subr.mxu0 0.0
    %1613 = vmatpush1.msra.mxu0 0.0
    %1614 = vmatprep.subr.mxu0 0.0
    %1615 = vmatpush1.msra.mxu0 0.0
    %1616 = vmatprep.subr.mxu0 0.0
    %1617 = vmatpush1.msra.mxu0 0.0
    %1618 = vmatprep.subr.mxu0 0.0
    %1619 = vmatpush1.msra.mxu0 0.0
    %1620 = vmatprep.subr.mxu0 0.0
    %1621 = vmatpush1.msra.mxu0 0.0
    %1622 = vmatprep.subr.mxu0 0.0
    %1623 = vmatpush1.msra.mxu0 0.0
    %1624 = vmatprep.subr.mxu0 0.0
    %1625 = vmatpush1.msra.mxu0 0.0
    %1626 = vmatprep.subr.mxu0 0.0
    %1627 = vmatpush1.msra.mxu0 0.0
    %1628 = vmatprep.subr.mxu0 0.0
    %1629 = vmatpush1.msra.mxu0 0.0
    %1630 = vmatprep.subr.mxu0 0.0
    %1631 = vmatpush1.msra.mxu0 0.0
    %1632 = vmatprep.mubr.f32.mxu0 0.0
    %1633 = vmatmul.mubr.f32.gmra.mrb[0].mxu0 %v1566
    %v1634 = vpop.f32.mrb[0].mxu0
    %v1635 = vadd.f32 %v1563, %v1634
    %v1636 = vpop.f32.mrb[0].mxu0
    %1637 = vdwg.mxu0
    %1638 = vst [vmem:[#allocation10] sm:$0xff] %v1635
    // Predicated region
    $region54: #{tpu_custom_call.1} parent=1 // pred_check
      _
    $region55: #{tpu_custom_call.1} parent=1 // pred_check_branch
      %1640 = sbr.rel (0) target = $region57
    $region56: #{tpu_custom_call.1} parent=1 // pred_region
      %s1642 = ssub.s32 128, 128
      %1643 = vsyncadd [#allocation7], %s1642
      %s1645 = sshll.u32 [#allocation10], 4
      %s1646 = int_to_ptr.vmem [resolvable:$true] %s1645
      %1648 = dma.vmem_to_hbm [thread:$0]  %s1646, 128, %s11, [#allocation7]
    $region57: #{tpu_custom_call.1} parent=1 // pred_fallthru
      _
    // Predicated region
    $region58: #{tpu_custom_call.1} parent=1 // pred_check
      _
    $region59: #{tpu_custom_call.1} parent=1 // pred_check_branch
      %1650 = sbr.rel (0) target = $region61
    $region60: #{tpu_custom_call.1} parent=1 // pred_region
      %1651 = dma.done [#allocation7], 128
    $region61: #{tpu_custom_call.1} parent=1 // pred_fallthru
      _
    %1652 = vsyncpa [#allocation6], 1
    %1653 = vsyncpa [#allocation9], 1
    %1654 = vsyncpa [#allocation7], 1

</llo_original>
